<compile_context>
chip_gen: v7x
topology: tpu7x:2x2x1
jax: 0.10.0
libtpu: 0.0.40
codegen_flags: <defaults>
</compile_context>

<pallas_src>
import functools

import jax
import jax.numpy as jnp
from jax import lax
from jax.experimental import pallas as pl
from jax.experimental.pallas import tpu as pltpu

DROPOUT_P = 0.2


def _round_up(a, b):
    return (a + b - 1) // b * b


def _ffw_kernel(seed_ref, x_ref, w1_ref, b1_ref, w2_ref, b2_ref, o_ref, acc_ref,
                *, dropout_p, training):
    # grid = (token tiles, hidden chunks); hidden axis is the reduction axis.
    # All pallas primitives (program_id / num_programs) and the SMEM seed read are
    # evaluated at top level so nothing pallas-specific lives inside a cond body.
    j = pl.program_id(1)
    last_j = pl.num_programs(1) - 1
    tile_row0 = pl.program_id(0) * o_ref.shape[0]   # first global row of this token tile
    seed = seed_ref[0].astype(jnp.uint32)

    @pl.when(j == 0)
    def _():
        acc_ref[...] = jnp.zeros_like(acc_ref)

    # Linear1 chunk + bias + ReLU (bf16 operands, f32 accumulation), then Linear2 chunk.
    h = jnp.dot(x_ref[...], w1_ref[...], preferred_element_type=jnp.float32)
    h = jnp.maximum(h + b1_ref[...], 0.0)
    acc_ref[...] += jnp.dot(h.astype(x_ref.dtype), w2_ref[...],
                            preferred_element_type=jnp.float32)

    @pl.when(j == last_j)
    def _():
        y = acc_ref[...] + b2_ref[...]
        if training and dropout_p > 0.0:
            # Inverted dropout. Counter-based hash PRNG (murmur-style finalizer),
            # keyed on (seed, global element index): portable + order independent.
            tm, c = o_ref.shape
            rows = lax.broadcasted_iota(jnp.int32, (tm, c), 0)
            cols = lax.broadcasted_iota(jnp.int32, (tm, c), 1)
            gid = ((tile_row0 + rows) * c + cols).astype(jnp.uint32)
            h32 = gid ^ (seed * jnp.uint32(0x9E3779B9))
            h32 = h32 ^ (h32 >> 16)
            h32 = h32 * jnp.uint32(0x85EBCA6B)
            h32 = h32 ^ (h32 >> 13)
            h32 = h32 * jnp.uint32(0xC2B2AE35)
            h32 = h32 ^ (h32 >> 16)
            # 24-bit uniform vs integer threshold (no float convert on the mask path).
            thresh = jnp.int32(int(round(dropout_p * (1 << 24))))
            keep = (h32 >> 8).astype(jnp.int32) >= thresh
            y = jnp.where(keep, y * (1.0 / (1.0 - dropout_p)), 0.0)
        o_ref[...] = y.astype(o_ref.dtype)


def feed_forward(x, params, *, seed=0, training=True, tm=256, th=512):
    """x: (B, T, C). params: w1 (C, 4C), b1 (4C,), w2 (4C, C), b2 (C,)."""
    B, T, C = x.shape
    H = params["w1"].shape[1]
    M = B * T

    x2d = x.reshape(M, C)

    # Token tile: as large as requested, clamped to the (padded) token count, multiple of 8.
    tm_eff = min(tm, _round_up(M, 8))
    M_pad = _round_up(M, tm_eff)
    if M_pad != M:
        x2d = jnp.pad(x2d, ((0, M_pad - M), (0, 0)))

    # Hidden chunk: tile H so the (tm, th) intermediate stays bounded; fall back to full H.
    th_eff = th if (H % th == 0) else H
    nh = H // th_eff

    # bf16 operands for the MXU; biases / accumulation stay f32.
    xin = x2d.astype(jnp.bfloat16)
    w1 = params["w1"].astype(jnp.bfloat16)
    w2 = params["w2"].astype(jnp.bfloat16)
    b1 = params["b1"].astype(jnp.float32).reshape(1, H)
    b2 = params["b2"].astype(jnp.float32).reshape(1, C)

    kernel = functools.partial(_ffw_kernel, dropout_p=DROPOUT_P, training=training)

    out2d = pl.pallas_call(
        kernel,
        out_shape=jax.ShapeDtypeStruct((M_pad, C), x.dtype),
        grid_spec=pltpu.PrefetchScalarGridSpec(
            num_scalar_prefetch=1,                       # seed scalar lands in SMEM
            grid=(M_pad // tm_eff, nh),
            in_specs=[
                pl.BlockSpec((tm_eff, C), lambda i, j, s: (i, 0)),   # x token tile
                pl.BlockSpec((C, th_eff), lambda i, j, s: (0, j)),   # w1 chunk
                pl.BlockSpec((1, th_eff), lambda i, j, s: (0, j)),   # b1 chunk
                pl.BlockSpec((th_eff, C), lambda i, j, s: (j, 0)),   # w2 chunk
                pl.BlockSpec((1, C), lambda i, j, s: (0, 0)),        # b2
            ],
            out_specs=pl.BlockSpec((tm_eff, C), lambda i, j, s: (i, 0)),
            scratch_shapes=[pltpu.VMEM((tm_eff, C), jnp.float32)],   # f32 accumulator
        ),
        compiler_params=pltpu.CompilerParams(
            dimension_semantics=("parallel", "arbitrary"),
        ),
    )(jnp.asarray([seed], dtype=jnp.int32), xin, w1, b1, w2, b2)

    return out2d[:M].reshape(B, T, C)


def init_params(key, n_embed):
    """Deterministic init matching torch.nn.Linear default (U[-1/sqrt(fan_in), 1/sqrt(fan_in)])."""
    hidden = 4 * n_embed
    k1, k2, k3, k4 = jax.random.split(key, 4)
    bound1 = 1.0 / (n_embed ** 0.5)
    bound2 = 1.0 / (hidden ** 0.5)
    return {
        "w1": jax.random.uniform(k1, (n_embed, hidden), jnp.float32, -bound1, bound1),
        "b1": jax.random.uniform(k2, (hidden,), jnp.float32, -bound1, bound1),
        "w2": jax.random.uniform(k3, (hidden, n_embed), jnp.float32, -bound2, bound2),
        "b2": jax.random.uniform(k4, (n_embed,), jnp.float32, -bound2, bound2),
    }


if __name__ == "__main__":
    # Small shapes consistent with the module: n_embed=384, short sequence.
    B, T, C = 2, 32, 384
    key = jax.random.PRNGKey(0)
    kx, kp = jax.random.split(key)
    x = jax.random.normal(kx, (B, T, C), dtype=jnp.float32)
    params = init_params(kp, C)

    # Eval-mode correctness vs. a reference that uses the same bf16 operand rounding.
    y_eval = jax.block_until_ready(feed_forward(x, params, training=False))
    xr = x.reshape(-1, C).astype(jnp.bfloat16).astype(jnp.float32)
    w1r = params["w1"].astype(jnp.bfloat16).astype(jnp.float32)
    w2r = params["w2"].astype(jnp.bfloat16).astype(jnp.float32)
    h_ref = jnp.maximum(xr @ w1r + params["b1"], 0.0)
    h_ref = h_ref.astype(jnp.bfloat16).astype(jnp.float32)
    y_ref = (h_ref @ w2r + params["b2"]).reshape(B, T, C)
    assert jnp.allclose(y_eval, y_ref, atol=3e-2, rtol=3e-2), "eval-mode mismatch"

    # Training-mode forward: inverted dropout applied in-kernel.
    # TODO(synk): dropout uses an in-kernel counter-hash RNG, so the mask stream differs
    # from torch's RNG (semantics — Bernoulli(1-p) keep + 1/(1-p) scale — match).
    y_train = jax.block_until_ready(feed_forward(x, params, seed=1234, training=True))
    assert y_train.shape == (B, T, C)
    drop_frac = float(jnp.mean(y_train == 0.0))
    assert abs(drop_frac - DROPOUT_P) < 0.05, f"dropout rate off: {drop_frac}"
    mask = y_train != 0.0
    kept_ok = jnp.allclose(jnp.where(mask, y_train, 0.0),
                           jnp.where(mask, y_eval / (1.0 - DROPOUT_P), 0.0),
                           atol=1e-4, rtol=1e-4)
    assert kept_ok, "kept elements not scaled by 1/(1-p)"

    print("KERNEL_OK")
</pallas_src>

<mosaic_0001>
module attributes {stable_mosaic.version = 11 : i64} {
  func.func @_ffw_kernel(%arg0: i32, %arg1: i32, %arg2: memref<1xi32, #tpu.memory_space<smem>>, %arg3: memref<64x384xbf16, #tpu.memory_space<vmem>>, %arg4: memref<384x512xbf16, #tpu.memory_space<vmem>>, %arg5: memref<1x512xf32, #tpu.memory_space<vmem>>, %arg6: memref<512x384xbf16, #tpu.memory_space<vmem>>, %arg7: memref<1x384xf32, #tpu.memory_space<vmem>>, %arg8: memref<64x384xf32, #tpu.memory_space<vmem>>, %arg9: memref<64x384xf32, #tpu.memory_space<vmem>>) attributes {dimension_semantics = [#tpu.dimension_semantics<parallel>, #tpu.dimension_semantics<arbitrary>], iteration_bounds = array<i64: 1, 3>, scalar_prefetch = 1 : i64, scratch_operands = 1 : i64, tpu.core_type = #tpu.core_type<tc>, window_params = [{transform_indices = @transform_0, window_bounds = array<i64: 64, 384>}, {transform_indices = @transform_1, window_bounds = array<i64: 384, 512>}, {transform_indices = @transform_2, window_bounds = array<i64: 1, 512>}, {transform_indices = @transform_3, window_bounds = array<i64: 512, 384>}, {pipeline_mode = #tpu.pipeline_mode<synchronous>, transform_indices = @transform_4, window_bounds = array<i64: 1, 384>}, {transform_indices = @transform_5, window_bounds = array<i64: 64, 384>}]} {
    %c0_i32 = arith.constant 0 : i32
    %0 = arith.cmpi eq, %arg1, %c0_i32 : i32
    %1 = arith.extui %0 : i1 to i32
    %c0_i32_0 = arith.constant 0 : i32
    %2 = arith.cmpi ne, %1, %c0_i32_0 : i32
    scf.if %2 {
      %cst_15 = arith.constant 0.000000e+00 : f32
      %20 = vector.broadcast %cst_15 : f32 to vector<64x384xf32>
      %c0_16 = arith.constant 0 : index
      %c0_17 = arith.constant 0 : index
      %21 = vector.load %arg9[%c0_16, %c0_17] : memref<64x384xf32, #tpu.memory_space<vmem>>, vector<64x384xf32>
      tpu.vector_store %arg9[%c0_16, %c0_17], %20 {strides = array<i32>} : memref<64x384xf32, #tpu.memory_space<vmem>>, vector<64x384xf32>,
    } else {
    }
    %c0 = arith.constant 0 : index
    %c0_1 = arith.constant 0 : index
    %3 = vector.load %arg3[%c0, %c0_1] : memref<64x384xbf16, #tpu.memory_space<vmem>>, vector<64x384xbf16>
    %c0_2 = arith.constant 0 : index
    %c0_3 = arith.constant 0 : index
    %4 = vector.load %arg4[%c0_2, %c0_3] : memref<384x512xbf16, #tpu.memory_space<vmem>>, vector<384x512xbf16>
    %cst = arith.constant dense<0.000000e+00> : vector<64x512xf32>
    %5 = tpu.matmul %3, %4, %cst {dimension_numbers = #tpu.dot_dimension_numbers<[1], [0], [0], [1], [0, 0, 1, 1], [], []>} : vector<64x384xbf16>, vector<384x512xbf16>, vector<64x512xf32> -> vector<64x512xf32>
    %c0_4 = arith.constant 0 : index
    %c0_5 = arith.constant 0 : index
    %6 = vector.load %arg5[%c0_4, %c0_5] : memref<1x512xf32, #tpu.memory_space<vmem>>, vector<1x512xf32>
    %7 = vector.broadcast %6 : vector<1x512xf32> to vector<64x512xf32>
    %8 = arith.addf %5, %7 : vector<64x512xf32>
    %cst_6 = arith.constant 0.000000e+00 : f32
    %9 = vector.broadcast %cst_6 : f32 to vector<64x512xf32>
    %10 = arith.maximumf %8, %9 : vector<64x512xf32>
    %c0_7 = arith.constant 0 : index
    %c0_8 = arith.constant 0 : index
    %11 = vector.load %arg9[%c0_7, %c0_8] : memref<64x384xf32, #tpu.memory_space<vmem>>, vector<64x384xf32>
    %12 = arith.truncf %10 : vector<64x512xf32> to vector<64x512xbf16>
    %c0_9 = arith.constant 0 : index
    %c0_10 = arith.constant 0 : index
    %13 = vector.load %arg6[%c0_9, %c0_10] : memref<512x384xbf16, #tpu.memory_space<vmem>>, vector<512x384xbf16>
    %cst_11 = arith.constant dense<0.000000e+00> : vector<64x384xf32>
    %14 = tpu.matmul %12, %13, %cst_11 {dimension_numbers = #tpu.dot_dimension_numbers<[1], [0], [0], [1], [0, 0, 1, 1], [], []>} : vector<64x512xbf16>, vector<512x384xbf16>, vector<64x384xf32> -> vector<64x384xf32>
    %15 = arith.addf %11, %14 : vector<64x384xf32>
    %c0_12 = arith.constant 0 : index
    %c0_13 = arith.constant 0 : index
    %16 = vector.load %arg9[%c0_12, %c0_13] : memref<64x384xf32, #tpu.memory_space<vmem>>, vector<64x384xf32>
    tpu.vector_store %arg9[%c0_12, %c0_13], %15 {strides = array<i32>} : memref<64x384xf32, #tpu.memory_space<vmem>>, vector<64x384xf32>,
    %c2_i32 = arith.constant 2 : i32
    %17 = arith.cmpi eq, %arg1, %c2_i32 : i32
    %18 = arith.extui %17 : i1 to i32
    %c0_i32_14 = arith.constant 0 : i32
    %19 = arith.cmpi ne, %18, %c0_i32_14 : i32
    scf.if %19 {
      %c0_15 = arith.constant 0 : index
      %c0_16 = arith.constant 0 : index
      %20 = vector.load %arg9[%c0_15, %c0_16] : memref<64x384xf32, #tpu.memory_space<vmem>>, vector<64x384xf32>
      %c0_17 = arith.constant 0 : index
      %c0_18 = arith.constant 0 : index
      %21 = vector.load %arg7[%c0_17, %c0_18] : memref<1x384xf32, #tpu.memory_space<vmem>>, vector<1x384xf32>
      %22 = vector.broadcast %21 : vector<1x384xf32> to vector<64x384xf32>
      %23 = arith.addf %20, %22 : vector<64x384xf32>
      %c0_19 = arith.constant 0 : index
      %c0_20 = arith.constant 0 : index
      %24 = vector.load %arg8[%c0_19, %c0_20] : memref<64x384xf32, #tpu.memory_space<vmem>>, vector<64x384xf32>
      tpu.vector_store %arg8[%c0_19, %c0_20], %23 {strides = array<i32>} : memref<64x384xf32, #tpu.memory_space<vmem>>, vector<64x384xf32>,
    } else {
    }
    return
  }
  func.func @transform_0(%arg0: i32, %arg1: i32, %arg2: memref<1xi32, #tpu.memory_space<smem>>) -> (i32, i32) {
    %c0_i32 = arith.constant 0 : i32
    %c0_i32_0 = arith.constant 0 : i32
    return %arg0, %c0_i32 : i32, i32
  }
  func.func @transform_1(%arg0: i32, %arg1: i32, %arg2: memref<1xi32, #tpu.memory_space<smem>>) -> (i32, i32) {
    %c0_i32 = arith.constant 0 : i32
    %c0_i32_0 = arith.constant 0 : i32
    return %c0_i32, %arg1 : i32, i32
  }
  func.func @transform_2(%arg0: i32, %arg1: i32, %arg2: memref<1xi32, #tpu.memory_space<smem>>) -> (i32, i32) {
    %c0_i32 = arith.constant 0 : i32
    %c0_i32_0 = arith.constant 0 : i32
    return %c0_i32, %arg1 : i32, i32
  }
  func.func @transform_3(%arg0: i32, %arg1: i32, %arg2: memref<1xi32, #tpu.memory_space<smem>>) -> (i32, i32) {
    %c0_i32 = arith.constant 0 : i32
    %c0_i32_0 = arith.constant 0 : i32
    return %arg1, %c0_i32 : i32, i32
  }
  func.func @transform_4(%arg0: i32, %arg1: i32, %arg2: memref<1xi32, #tpu.memory_space<smem>>) -> (i32, i32) {
    %c0_i32 = arith.constant 0 : i32
    %c0_i32_0 = arith.constant 0 : i32
    %c0_i32_1 = arith.constant 0 : i32
    return %c0_i32, %c0_i32_0 : i32, i32
  }
  func.func @transform_5(%arg0: i32, %arg1: i32, %arg2: memref<1xi32, #tpu.memory_space<smem>>) -> (i32, i32) {
    %c0_i32 = arith.constant 0 : i32
    %c0_i32_0 = arith.constant 0 : i32
    return %arg0, %c0_i32 : i32, i32
  }
}

</mosaic_0001>

<llo_original>
// kernel: tpu_custom_call.1
$region0: #{tpu_custom_call.1}
  #allocation0 [shape = 'u32[]', space=smem, size = 0x4, offset = 0x4, fixed_abs, tag = 'smem constant byte address 0x4 - core index']
  #allocation1 [shape = 'u32[144,128]{1,0:T(1,128)}', space=vmem, size = 0x12000, scoped, tag = 'internal scratch']
  #allocation2 [shape = 'f32[64,384]{1,0:T(8,128)}', space=vmem, size = 0x18000, scoped, tag = 'scratch operand']
  #allocation3 [shape = 's32[1]{0}', space=sflag, size = 0x4, scoped, tag = 'scoped memory for tpu_custom_call.1']
  #allocation4 [shape = 's32[1]{0:T(128)S(6)}', space=smem, size = 0x200, scoped, tag = 'prefetched SMEM operand 0']
  %s0 = inlined_call_operand.<no memory space> [shape: s32[1], index: 0, kind: input, shape index: {}]
  %s1 = inlined_call_operand.hbm [shape: bf16[64,384], index: 1, kind: input, shape index: {}]
  %s2 = inlined_call_operand.hbm [shape: bf16[384,1536], index: 2, kind: input, shape index: {}]
  %s3 = inlined_call_operand.hbm [shape: f32[1,1536], index: 3, kind: input, shape index: {}]
  %s4 = inlined_call_operand.hbm [shape: bf16[1536,384], index: 4, kind: input, shape index: {}]
  %s5 = inlined_call_operand.hbm [shape: f32[1,384], index: 5, kind: input, shape index: {}]
  %s6 = inlined_call_operand.hbm [shape: f32[64,384], index: 6, kind: output, shape index: {}]
  %s7 = sld [smem:[#allocation0]]
  $region81: #{tpu_custom_call.1} parent=0
    _
  %s9 = ssub.s32 1, %s7
  %s10 = scalar_select 0, %s9, %s7
  %11 = sst [smem:[#allocation4]] %s0
  $region1: #{tpu_custom_call.1} parent=0
    #allocation5 [shape = 'u8[49152]{0}', space=vmem, size = 0xc000, scoped, tag = 'input window, operand 1, single buffered']
    #allocation6 [shape = 's32[2]{0}', space=sflag, size = 0x8, scoped, tag = 'scoped memory for tpu_custom_call.1']
    #allocation7 [shape = 's32[2]{0}', space=sflag, size = 0x8, scoped, tag = 'scoped memory for tpu_custom_call.1']
    #allocation8 [shape = 'u8[786432]{0}', space=vmem, size = 0xc0000, scoped, tag = 'input window, operand 2']
    #allocation9 [shape = 's32[2]{0}', space=sflag, size = 0x8, scoped, tag = 'scoped memory for tpu_custom_call.1']
    #allocation10 [shape = 'u8[4096]{0}', space=vmem, size = 0x1000, scoped, tag = 'input window, operand 3']
    #allocation11 [shape = 'u8[786432]{0}', space=vmem, size = 0xc0000, scoped, tag = 'input window, operand 4']
    #allocation12 [shape = 's32[2]{0}', space=sflag, size = 0x8, scoped, tag = 'scoped memory for tpu_custom_call.1']
    #allocation13 [shape = 'u8[1536]{0}', space=vmem, size = 0x800, scoped, tag = 'input window, operand 5, single buffered']
    #allocation14 [shape = 'u8[98304]{0}', space=vmem, size = 0x18000, scoped, tag = 'output window, operand 0, single buffered']
    %12 = vsyncpa [#allocation6], 0
    %13 = vsyncpa [#allocation9], 0
    %s14 = scalar_lea.sflag [#allocation9], 1
    %15 = vsyncpa %s14, 0
    %16 = vsyncpa [#allocation12], 0
    %s17 = scalar_lea.sflag [#allocation12], 1
    %18 = vsyncpa %s17, 0
    %19 = vsyncpa [#allocation7], 0
    loop: start=0, step=1, limit=5
    $region2: #{tpu_custom_call.1} parent=1 // loop_pre_header
      _
    $region3: #{tpu_custom_call.1} parent=1 // loop_header
      %s21 = sphi 0, %s25
      %p22 = scmp.ge.s32.totalorder %s21, 5
      %s28 = sphi 0, %s40
      %s29 = sphi 0, %s36
      %s30 = sphi 0, %s28
      %s31 = sphi 0, %s29
      %s32 = sphi 0, %s30
      %s33 = sphi 0, %s31
      %s43 = sphi 0, %s45
      %s46 = sphi 0, %s43
      %s47 = sphi 0, %s46
      %s63 = sphi 0, %s47
      %s69 = sphi 0, %s71
      %s72 = sphi 0, %s69
      %s73 = sphi 0, %s72
      %s89 = sphi 0, %s73
      %s95 = sphi 0, %s97
      %s98 = sphi 0, %s95
      %s99 = sphi 0, %s98
      %s115 = sphi 0, %s99
      %s121 = sphi 0, %s123
      %s124 = sphi 0, %s121
      %s125 = sphi 0, %s124
      %s141 = sphi 0, %s125
      %s145 = sphi 0, %s145
      %s147 = sphi 0, %s145
      %s148 = sphi 0, %s147
      %s162 = sphi 0, %s148
      %s168 = sphi 0, %s170
      %s171 = sphi 0, %s168
      %s172 = sphi 0, %s171
      %s188 = sphi 0, %s172
    $region4: #{tpu_custom_call.1} parent=1 // loop_header_branch
      %24 = sbr.rel (%p22) target = $region8
    $region5: #{tpu_custom_call.1} parent=1 // loop_body
      %s26 = ssub.s32 %s21, 1
      %s27 = ssub.s32 %s21, 2
      %s34 = sadd.s32 1, %s29
      %p35 = scmp.ge.s32.totalorder %s34, 3
      %s36 = scalar_select %p35, 0, %s34
      %s37 = sadd.s32 1, %s28
      %s38 = scalar_select %p35, %s37, %s28
      %p39 = scmp.ge.s32.totalorder %s38, 1
      %s40 = scalar_select %p39, 0, %s38
      %s41 = ssub.s32 %s28, %s40
      %p42 = scmp.eq.s32.totalorder %s41, 0
      %s44 = sadd.s32 %s43, 1
      %s45 = scalar_select %p42, %s43, %s44
      %p48 = pneg %p42
      %p49 = scmp.eq.s32.totalorder %s21, 2
      %p50 = por %p48, %p49
      %p51 = scmp.ne.s32.totalorder %s43, %s46
      %p52 = scmp.eq.s32.totalorder %s21, 0
      %p53 = por %p51, %p52
      %p54 = scmp.ne.s32.totalorder %s43, %s46
      %p55 = scmp.eq.s32.totalorder %s26, 2
      %p56 = por %p54, %p55
      %p57 = scmp.ne.s32.totalorder %s46, %s47
      %p58 = scmp.eq.s32.totalorder %s26, 0
      %p59 = por %p57, %p58
      %p60 = scmp.ne.s32.totalorder %s46, %s47
      %p61 = scmp.eq.s32.totalorder %s27, 2
      %p62 = por %p60, %p61
      %p64 = scmp.ne.s32.totalorder %s47, %s63
      %p65 = scmp.eq.s32.totalorder %s27, 0
      %p66 = por %p64, %p65
      %s67 = ssub.s32 %s29, %s36
      %p68 = scmp.eq.s32.totalorder %s67, 0
      %s70 = sadd.s32 %s69, 1
      %s71 = scalar_select %p68, %s69, %s70
      %p74 = pneg %p68
      %p75 = scmp.eq.s32.totalorder %s21, 2
      %p76 = por %p74, %p75
      %p77 = scmp.ne.s32.totalorder %s69, %s72
      %p78 = scmp.eq.s32.totalorder %s21, 0
      %p79 = por %p77, %p78
      %p80 = scmp.ne.s32.totalorder %s69, %s72
      %p81 = scmp.eq.s32.totalorder %s26, 2
      %p82 = por %p80, %p81
      %p83 = scmp.ne.s32.totalorder %s72, %s73
      %p84 = scmp.eq.s32.totalorder %s26, 0
      %p85 = por %p83, %p84
      %p86 = scmp.ne.s32.totalorder %s72, %s73
      %p87 = scmp.eq.s32.totalorder %s27, 2
      %p88 = por %p86, %p87
      %p90 = scmp.ne.s32.totalorder %s73, %s89
      %p91 = scmp.eq.s32.totalorder %s27, 0
      %p92 = por %p90, %p91
      %s93 = ssub.s32 %s29, %s36
      %p94 = scmp.eq.s32.totalorder %s93, 0
      %s96 = sadd.s32 %s95, 1
      %s97 = scalar_select %p94, %s95, %s96
      %p100 = pneg %p94
      %p101 = scmp.eq.s32.totalorder %s21, 2
      %p102 = por %p100, %p101
      %p103 = scmp.ne.s32.totalorder %s95, %s98
      %p104 = scmp.eq.s32.totalorder %s21, 0
      %p105 = por %p103, %p104
      %p106 = scmp.ne.s32.totalorder %s95, %s98
      %p107 = scmp.eq.s32.totalorder %s26, 2
      %p108 = por %p106, %p107
      %p109 = scmp.ne.s32.totalorder %s98, %s99
      %p110 = scmp.eq.s32.totalorder %s26, 0
      %p111 = por %p109, %p110
      %p112 = scmp.ne.s32.totalorder %s98, %s99
      %p113 = scmp.eq.s32.totalorder %s27, 2
      %p114 = por %p112, %p113
      %p116 = scmp.ne.s32.totalorder %s99, %s115
      %p117 = scmp.eq.s32.totalorder %s27, 0
      %p118 = por %p116, %p117
      %s119 = ssub.s32 %s29, %s36
      %p120 = scmp.eq.s32.totalorder %s119, 0
      %s122 = sadd.s32 %s121, 1
      %s123 = scalar_select %p120, %s121, %s122
      %p126 = pneg %p120
      %p127 = scmp.eq.s32.totalorder %s21, 2
      %p128 = por %p126, %p127
      %p129 = scmp.ne.s32.totalorder %s121, %s124
      %p130 = scmp.eq.s32.totalorder %s21, 0
      %p131 = por %p129, %p130
      %p132 = scmp.ne.s32.totalorder %s121, %s124
      %p133 = scmp.eq.s32.totalorder %s26, 2
      %p134 = por %p132, %p133
      %p135 = scmp.ne.s32.totalorder %s124, %s125
      %p136 = scmp.eq.s32.totalorder %s26, 0
      %p137 = por %p135, %p136
      %p138 = scmp.ne.s32.totalorder %s124, %s125
      %p139 = scmp.eq.s32.totalorder %s27, 2
      %p140 = por %p138, %p139
      %p142 = scmp.ne.s32.totalorder %s125, %s141
      %p143 = scmp.eq.s32.totalorder %s27, 0
      %p144 = por %p142, %p143
      %s146 = sadd.s32 %s145, 1
      %p149 = scmp.eq.s32.totalorder %s21, 2
      %p150 = scmp.ne.s32.totalorder %s145, %s147
      %p151 = scmp.eq.s32.totalorder %s21, 0
      %p152 = por %p150, %p151
      %p153 = scmp.ne.s32.totalorder %s145, %s147
      %p154 = scmp.eq.s32.totalorder %s26, 2
      %p155 = por %p153, %p154
      %p156 = scmp.ne.s32.totalorder %s147, %s148
      %p157 = scmp.eq.s32.totalorder %s26, 0
      %p158 = por %p156, %p157
      %p159 = scmp.ne.s32.totalorder %s147, %s148
      %p160 = scmp.eq.s32.totalorder %s27, 2
      %p161 = por %p159, %p160
      %p163 = scmp.ne.s32.totalorder %s148, %s162
      %p164 = scmp.eq.s32.totalorder %s27, 0
      %p165 = por %p163, %p164
      %s166 = ssub.s32 %s28, %s40
      %p167 = scmp.eq.s32.totalorder %s166, 0
      %s169 = sadd.s32 %s168, 1
      %s170 = scalar_select %p167, %s168, %s169
      %p173 = pneg %p167
      %p174 = scmp.eq.s32.totalorder %s21, 2
      %p175 = por %p173, %p174
      %p176 = scmp.ne.s32.totalorder %s168, %s171
      %p177 = scmp.eq.s32.totalorder %s21, 0
      %p178 = por %p176, %p177
      %p179 = scmp.ne.s32.totalorder %s168, %s171
      %p180 = scmp.eq.s32.totalorder %s26, 2
      %p181 = por %p179, %p180
      %p182 = scmp.ne.s32.totalorder %s171, %s172
      %p183 = scmp.eq.s32.totalorder %s26, 0
      %p184 = por %p182, %p183
      %p185 = scmp.ne.s32.totalorder %s171, %s172
      %p186 = scmp.eq.s32.totalorder %s27, 2
      %p187 = por %p185, %p186
      %p189 = scmp.ne.s32.totalorder %s172, %s188
      %p190 = scmp.eq.s32.totalorder %s27, 0
      %p191 = por %p189, %p190
      %p192 = scmp.le.s32.totalorder 1, %s21
      %p193 = scmp.lt.s32.totalorder %s21, 4
      %p194 = pnand %p192, %p193
      %p195 = pneg %p194
      // Predicated region
      $region9: #{tpu_custom_call.1} parent=5 // pred_check
        _
      $region10: #{tpu_custom_call.1} parent=5 // pred_check_branch
        %197 = sbr.rel (%p194) target = $region12
      $region11: #{tpu_custom_call.1} parent=5 // pred_region
        %s198 = ssub.s32 %s21, 1
        // Predicated region
        $region13: #{tpu_custom_call.1} parent=11 // pred_check
          %p199 = pneg %p59
        $region14: #{tpu_custom_call.1} parent=11 // pred_check_branch
          %201 = sbr.rel (%p199) target = $region16
        $region15: #{tpu_custom_call.1} parent=11 // pred_region
          %s202 = smul.u32 8, %s30
          %s204 = ssub.s32 1536, 1536
          %205 = vsyncadd [#allocation6], %s204
          %s206 = smul.addr %s202, 3
          %s207 = smul.addr %s206, 64
          %s208 = scalar_lea.hbm %s1, %s207
          %s209 = sshll.u32 [#allocation5], 4
          %s210 = int_to_ptr.vmem [resolvable:$true] %s209
          %215 = dma.hbm_to_vmem [thread:$0]  %s208, 1536, %s210, [#allocation6], 192, 192, 12
        $region16: #{tpu_custom_call.1} parent=11 // pred_fallthru
          _
        // Predicated region
        $region17: #{tpu_custom_call.1} parent=11 // pred_check
          %p216 = pneg %p158
        $region18: #{tpu_custom_call.1} parent=11 // pred_check_branch
          %218 = sbr.rel (%p216) target = $region20
        $region19: #{tpu_custom_call.1} parent=11 // pred_region
          %s220 = ssub.s32 48, 48
          %221 = vsyncadd [#allocation12], %s220
          %s223 = sshll.u32 [#allocation13], 4
          %s224 = int_to_ptr.vmem [resolvable:$true] %s223
          %226 = dma.hbm_to_vmem [thread:$0]  %s5, 48, %s224, [#allocation12]
        $region20: #{tpu_custom_call.1} parent=11 // pred_fallthru
          _
      $region12: #{tpu_custom_call.1} parent=5 // pred_fallthru
        _
      %p227 = scmp.lt.s32.totalorder %s21, 3
      // Predicated region
      $region21: #{tpu_custom_call.1} parent=5 // pred_check
        %p228 = pneg %p227
      $region22: #{tpu_custom_call.1} parent=5 // pred_check_branch
        %230 = sbr.rel (%p228) target = $region24
      $region23: #{tpu_custom_call.1} parent=5 // pred_region
        // Predicated region
        $region25: #{tpu_custom_call.1} parent=23 // pred_check
          %p231 = pneg %p79
        $region26: #{tpu_custom_call.1} parent=23 // pred_check_branch
          %233 = sbr.rel (%p231) target = $region28
        $region27: #{tpu_custom_call.1} parent=23 // pred_region
          %s234 = sand.u32 %s21, 1
          %s235 = scalar_lea.sflag [#allocation9], %s234
          %s236 = sand.u32 %s69, 1
          %s237 = smul.addr %s236, 768
          %s238 = scalar_lea.vmem [#allocation8], %s237
          %s239 = smul.u32 4, %s29
          %s241 = ssub.s32 12288, 12288
          %242 = vsyncadd %s235, %s241
          %s243 = smul.addr %s239, 64
          %s244 = scalar_lea.hbm %s2, %s243
          %s245 = sshll.u32 %s238, 4
          %s246 = int_to_ptr.vmem [resolvable:$true] %s245
          %251 = dma.hbm_to_vmem [thread:$0]  %s244, 12288, %s246, %s235, 768, 256, 16
        $region28: #{tpu_custom_call.1} parent=23 // pred_fallthru
          _
        // Predicated region
        $region29: #{tpu_custom_call.1} parent=23 // pred_check
          %p252 = pneg %p105
        $region30: #{tpu_custom_call.1} parent=23 // pred_check_branch
          %254 = sbr.rel (%p252) target = $region32
        $region31: #{tpu_custom_call.1} parent=23 // pred_region
          %s255 = sand.u32 %s21, 1
          %s256 = scalar_lea.sflag [#allocation9], %s255
          %s257 = sand.u32 %s95, 1
          %s258 = smul.addr %s257, 4
          %s259 = scalar_lea.vmem [#allocation10], %s258
          %s260 = smul.u32 4, %s29
          %s262 = ssub.s32 64, 64
          %263 = vsyncadd %s256, %s262
          %s264 = smul.addr %s260, 16
          %s265 = scalar_lea.hbm %s3, %s264
          %s267 = sshll.u32 %s259, 4
          %s268 = int_to_ptr.vmem [resolvable:$true] %s267
          %270 = dma.hbm_to_vmem [thread:$0]  %s265, 64, %s268, %s256
        $region32: #{tpu_custom_call.1} parent=23 // pred_fallthru
          _
        // Predicated region
        $region33: #{tpu_custom_call.1} parent=23 // pred_check
          %p271 = pneg %p131
        $region34: #{tpu_custom_call.1} parent=23 // pred_check_branch
          %273 = sbr.rel (%p271) target = $region36
        $region35: #{tpu_custom_call.1} parent=23 // pred_region
          %s274 = sand.u32 %s21, 1
          %s275 = scalar_lea.sflag [#allocation12], %s274
          %s276 = sand.u32 %s121, 1
          %s277 = smul.addr %s276, 768
          %s278 = scalar_lea.vmem [#allocation11], %s277
          %s279 = smul.u32 64, %s29
          %s281 = ssub.s32 12288, 12288
          %282 = vsyncadd %s275, %s281
          %s283 = smul.addr %s279, 3
          %s284 = smul.addr %s283, 64
          %s285 = scalar_lea.hbm %s4, %s284
          %s286 = sshll.u32 %s278, 4
          %s287 = int_to_ptr.vmem [resolvable:$true] %s286
          %292 = dma.hbm_to_vmem [thread:$0]  %s285, 12288, %s287, %s275, 192, 192, 12
        $region36: #{tpu_custom_call.1} parent=23 // pred_fallthru
          _
      $region24: #{tpu_custom_call.1} parent=5 // pred_fallthru
        _
      %p293 = scmp.le.s32.totalorder 1, %s21
      %p294 = scmp.lt.s32.totalorder %s21, 4
      %p295 = pnand %p293, %p294
      %p296 = pneg %p295
      // Predicated region
      $region37: #{tpu_custom_call.1} parent=5 // pred_check
        _
      $region38: #{tpu_custom_call.1} parent=5 // pred_check_branch
        %298 = sbr.rel (%p295) target = $region40
      $region39: #{tpu_custom_call.1} parent=5 // pred_region
        %s299 = ssub.s32 %s21, 1
        // Predicated region
        $region41: #{tpu_custom_call.1} parent=39 // pred_check
          %p300 = pneg %p59
        $region42: #{tpu_custom_call.1} parent=39 // pred_check_branch
          %302 = sbr.rel (%p300) target = $region44
        $region43: #{tpu_custom_call.1} parent=39 // pred_region
          %303 = dma.done [#allocation6], 1536
        $region44: #{tpu_custom_call.1} parent=39 // pred_fallthru
          _
        %s304 = sand.u32 %s26, 1
        %s305 = scalar_lea.sflag [#allocation9], %s304
        %s306 = sand.u32 %s72, 1
        %s307 = smul.addr %s306, 768
        %s308 = scalar_lea.vmem [#allocation8], %s307
        // Predicated region
        $region45: #{tpu_custom_call.1} parent=39 // pred_check
          %p309 = pneg %p85
        $region46: #{tpu_custom_call.1} parent=39 // pred_check_branch
          %311 = sbr.rel (%p309) target = $region48
        $region47: #{tpu_custom_call.1} parent=39 // pred_region
          %312 = dma.done %s305, 12288
        $region48: #{tpu_custom_call.1} parent=39 // pred_fallthru
          _
        %s313 = sand.u32 %s26, 1
        %s314 = scalar_lea.sflag [#allocation9], %s313
        %s315 = sand.u32 %s98, 1
        %s316 = smul.addr %s315, 4
        %s317 = scalar_lea.vmem [#allocation10], %s316
        // Predicated region
        $region49: #{tpu_custom_call.1} parent=39 // pred_check
          %p318 = pneg %p111
        $region50: #{tpu_custom_call.1} parent=39 // pred_check_branch
          %320 = sbr.rel (%p318) target = $region52
        $region51: #{tpu_custom_call.1} parent=39 // pred_region
          %321 = dma.done %s314, 64
        $region52: #{tpu_custom_call.1} parent=39 // pred_fallthru
          _
        %s322 = sand.u32 %s26, 1
        %s323 = scalar_lea.sflag [#allocation12], %s322
        %s324 = sand.u32 %s124, 1
        %s325 = smul.addr %s324, 768
        %s326 = scalar_lea.vmem [#allocation11], %s325
        // Predicated region
        $region53: #{tpu_custom_call.1} parent=39 // pred_check
          %p327 = pneg %p137
        $region54: #{tpu_custom_call.1} parent=39 // pred_check_branch
          %329 = sbr.rel (%p327) target = $region56
        $region55: #{tpu_custom_call.1} parent=39 // pred_region
          %330 = dma.done %s323, 12288
        $region56: #{tpu_custom_call.1} parent=39 // pred_fallthru
          _
        // Predicated region
        $region57: #{tpu_custom_call.1} parent=39 // pred_check
          %p331 = pneg %p158
        $region58: #{tpu_custom_call.1} parent=39 // pred_check_branch
          %333 = sbr.rel (%p331) target = $region60
        $region59: #{tpu_custom_call.1} parent=39 // pred_region
          %334 = dma.done [#allocation12], 48
        $region60: #{tpu_custom_call.1} parent=39 // pred_fallthru
          _
        %p335 = pneg %p59
        %p336 = pneg %p56
        %s337 = sand.u32 %s26, 1
        %s338 = scalar_lea.sflag [#allocation9], %s337
        %s339 = sand.u32 %s72, 1
        %s340 = smul.addr %s339, 768
        %s341 = scalar_lea.vmem [#allocation8], %s340
        %p342 = pneg %p85
        %p343 = pneg %p82
        %s344 = sand.u32 %s26, 1
        %s345 = scalar_lea.sflag [#allocation9], %s344
        %s346 = sand.u32 %s98, 1
        %s347 = smul.addr %s346, 4
        %s348 = scalar_lea.vmem [#allocation10], %s347
        %p349 = pneg %p111
        %p350 = pneg %p108
        %s351 = sand.u32 %s26, 1
        %s352 = scalar_lea.sflag [#allocation12], %s351
        %s353 = sand.u32 %s124, 1
        %s354 = smul.addr %s353, 768
        %s355 = scalar_lea.vmem [#allocation11], %s354
        %p356 = pneg %p137
        %p357 = pneg %p134
        %p358 = pneg %p158
        %p359 = pneg %p155
        %p360 = pneg %p184
        %p361 = pneg %p181
        %s362 = smul.u32 8, %s30
        %s363 = smul.u32 4, %s31
        %s364 = smul.u32 4, %s31
        %s365 = smul.u32 64, %s31
        %s366 = smul.u32 8, %s30
        %p368 = scmp.eq.s32.totalorder %s31, 0
        // Predicated region
        $region61: #{tpu_custom_call.1} parent=39 // pred_check
          %p369 = pneg %p368
        $region62: #{tpu_custom_call.1} parent=39 // pred_check_branch
          %371 = sbr.rel (%p369) target = $region64
        $region63: #{tpu_custom_call.1} parent=39 // pred_region
          %372 = vst [vmem:[#allocation2] sm:$0xff] 0.0
          %373 = vst [vmem:[#allocation2 + $0x8] sm:$0xff] 0.0
          %374 = vst [vmem:[#allocation2 + $0x10] sm:$0xff] 0.0
          %375 = vst [vmem:[#allocation2 + $0x18] sm:$0xff] 0.0
          %376 = vst [vmem:[#allocation2 + $0x20] sm:$0xff] 0.0
          %377 = vst [vmem:[#allocation2 + $0x28] sm:$0xff] 0.0
          %378 = vst [vmem:[#allocation2 + $0x30] sm:$0xff] 0.0
          %379 = vst [vmem:[#allocation2 + $0x38] sm:$0xff] 0.0
          %380 = vst [vmem:[#allocation2 + $0x40] sm:$0xff] 0.0
          %381 = vst [vmem:[#allocation2 + $0x48] sm:$0xff] 0.0
          %382 = vst [vmem:[#allocation2 + $0x50] sm:$0xff] 0.0
          %383 = vst [vmem:[#allocation2 + $0x58] sm:$0xff] 0.0
          %384 = vst [vmem:[#allocation2 + $0x60] sm:$0xff] 0.0
          %385 = vst [vmem:[#allocation2 + $0x68] sm:$0xff] 0.0
          %386 = vst [vmem:[#allocation2 + $0x70] sm:$0xff] 0.0
          %387 = vst [vmem:[#allocation2 + $0x78] sm:$0xff] 0.0
          %388 = vst [vmem:[#allocation2 + $0x80] sm:$0xff] 0.0
          %389 = vst [vmem:[#allocation2 + $0x88] sm:$0xff] 0.0
          %390 = vst [vmem:[#allocation2 + $0x90] sm:$0xff] 0.0
          %391 = vst [vmem:[#allocation2 + $0x98] sm:$0xff] 0.0
          %392 = vst [vmem:[#allocation2 + $0xa0] sm:$0xff] 0.0
          %393 = vst [vmem:[#allocation2 + $0xa8] sm:$0xff] 0.0
          %394 = vst [vmem:[#allocation2 + $0xb0] sm:$0xff] 0.0
          %395 = vst [vmem:[#allocation2 + $0xb8] sm:$0xff] 0.0
        $region64: #{tpu_custom_call.1} parent=39 // pred_fallthru
          _
        %v396 = vld [vmem:[#allocation5] sm:$0xff]
        %v397 = vld [vmem:[#allocation5 + $0x8] sm:$0xf]
        %v398 = vld [vmem:[#allocation5 + $0xc] sm:$0xff]
        %v399 = vld [vmem:[#allocation5 + $0x14] sm:$0xf]
        %v400 = vld [vmem:[#allocation5 + $0x18] sm:$0xff]
        %v401 = vld [vmem:[#allocation5 + $0x20] sm:$0xf]
        %v402 = vld [vmem:[#allocation5 + $0x24] sm:$0xff]
        %v403 = vld [vmem:[#allocation5 + $0x2c] sm:$0xf]
        %v404 = vld [vmem:[#allocation5 + $0x30] sm:$0xff]
        %v405 = vld [vmem:[#allocation5 + $0x38] sm:$0xf]
        %v406 = vld [vmem:[#allocation5 + $0x3c] sm:$0xff]
        %v407 = vld [vmem:[#allocation5 + $0x44] sm:$0xf]
        %v408 = vld [vmem:[#allocation5 + $0x48] sm:$0xff]
        %v409 = vld [vmem:[#allocation5 + $0x50] sm:$0xf]
        %v410 = vld [vmem:[#allocation5 + $0x54] sm:$0xff]
        %v411 = vld [vmem:[#allocation5 + $0x5c] sm:$0xf]
        %v412 = vld [vmem:[%s308] sm:$0xff]
        %v413 = vld [vmem:[%s308 + $0x8] sm:$0xff]
        %v414 = vld [vmem:[%s308 + $0x10] sm:$0xff]
        %v415 = vld [vmem:[%s308 + $0x18] sm:$0xff]
        %v416 = vld [vmem:[%s308 + $0x20] sm:$0xff]
        %v417 = vld [vmem:[%s308 + $0x28] sm:$0xff]
        %v418 = vld [vmem:[%s308 + $0x30] sm:$0xff]
        %v419 = vld [vmem:[%s308 + $0x38] sm:$0xff]
        %v420 = vld [vmem:[%s308 + $0x40] sm:$0xff]
        %v421 = vld [vmem:[%s308 + $0x48] sm:$0xff]
        %v422 = vld [vmem:[%s308 + $0x50] sm:$0xff]
        %v423 = vld [vmem:[%s308 + $0x58] sm:$0xff]
        %v424 = vld [vmem:[%s308 + $0x60] sm:$0xff]
        %v425 = vld [vmem:[%s308 + $0x68] sm:$0xff]
        %v426 = vld [vmem:[%s308 + $0x70] sm:$0xff]
        %v427 = vld [vmem:[%s308 + $0x78] sm:$0xff]
        %v428 = vld [vmem:[%s308 + $0x80] sm:$0xff]
        %v429 = vld [vmem:[%s308 + $0x88] sm:$0xff]
        %v430 = vld [vmem:[%s308 + $0x90] sm:$0xff]
        %v431 = vld [vmem:[%s308 + $0x98] sm:$0xff]
        %v432 = vld [vmem:[%s308 + $0xa0] sm:$0xff]
        %v433 = vld [vmem:[%s308 + $0xa8] sm:$0xff]
        %v434 = vld [vmem:[%s308 + $0xb0] sm:$0xff]
        %v435 = vld [vmem:[%s308 + $0xb8] sm:$0xff]
        %v436 = vld [vmem:[%s308 + $0xc0] sm:$0xff]
        %v437 = vld [vmem:[%s308 + $0xc8] sm:$0xff]
        %v438 = vld [vmem:[%s308 + $0xd0] sm:$0xff]
        %v439 = vld [vmem:[%s308 + $0xd8] sm:$0xff]
        %v440 = vld [vmem:[%s308 + $0xe0] sm:$0xff]
        %v441 = vld [vmem:[%s308 + $0xe8] sm:$0xff]
        %v442 = vld [vmem:[%s308 + $0xf0] sm:$0xff]
        %v443 = vld [vmem:[%s308 + $0xf8] sm:$0xff]
        %v444 = vld [vmem:[%s308 + $0x100] sm:$0xff]
        %v445 = vld [vmem:[%s308 + $0x108] sm:$0xff]
        %v446 = vld [vmem:[%s308 + $0x110] sm:$0xff]
        %v447 = vld [vmem:[%s308 + $0x118] sm:$0xff]
        %v448 = vld [vmem:[%s308 + $0x120] sm:$0xff]
        %v449 = vld [vmem:[%s308 + $0x128] sm:$0xff]
        %v450 = vld [vmem:[%s308 + $0x130] sm:$0xff]
        %v451 = vld [vmem:[%s308 + $0x138] sm:$0xff]
        %v452 = vld [vmem:[%s308 + $0x140] sm:$0xff]
        %v453 = vld [vmem:[%s308 + $0x148] sm:$0xff]
        %v454 = vld [vmem:[%s308 + $0x150] sm:$0xff]
        %v455 = vld [vmem:[%s308 + $0x158] sm:$0xff]
        %v456 = vld [vmem:[%s308 + $0x160] sm:$0xff]
        %v457 = vld [vmem:[%s308 + $0x168] sm:$0xff]
        %v458 = vld [vmem:[%s308 + $0x170] sm:$0xff]
        %v459 = vld [vmem:[%s308 + $0x178] sm:$0xff]
        %v460 = vld [vmem:[%s308 + $0x180] sm:$0xff]
        %v461 = vld [vmem:[%s308 + $0x188] sm:$0xff]
        %v462 = vld [vmem:[%s308 + $0x190] sm:$0xff]
        %v463 = vld [vmem:[%s308 + $0x198] sm:$0xff]
        %v464 = vld [vmem:[%s308 + $0x1a0] sm:$0xff]
        %v465 = vld [vmem:[%s308 + $0x1a8] sm:$0xff]
        %v466 = vld [vmem:[%s308 + $0x1b0] sm:$0xff]
        %v467 = vld [vmem:[%s308 + $0x1b8] sm:$0xff]
        %v468 = vld [vmem:[%s308 + $0x1c0] sm:$0xff]
        %v469 = vld [vmem:[%s308 + $0x1c8] sm:$0xff]
        %v470 = vld [vmem:[%s308 + $0x1d0] sm:$0xff]
        %v471 = vld [vmem:[%s308 + $0x1d8] sm:$0xff]
        %v472 = vld [vmem:[%s308 + $0x1e0] sm:$0xff]
        %v473 = vld [vmem:[%s308 + $0x1e8] sm:$0xff]
        %v474 = vld [vmem:[%s308 + $0x1f0] sm:$0xff]
        %v475 = vld [vmem:[%s308 + $0x1f8] sm:$0xff]
        %v476 = vld [vmem:[%s308 + $0x200] sm:$0xff]
        %v477 = vld [vmem:[%s308 + $0x208] sm:$0xff]
        %v478 = vld [vmem:[%s308 + $0x210] sm:$0xff]
        %v479 = vld [vmem:[%s308 + $0x218] sm:$0xff]
        %v480 = vld [vmem:[%s308 + $0x220] sm:$0xff]
        %v481 = vld [vmem:[%s308 + $0x228] sm:$0xff]
        %v482 = vld [vmem:[%s308 + $0x230] sm:$0xff]
        %v483 = vld [vmem:[%s308 + $0x238] sm:$0xff]
        %v484 = vld [vmem:[%s308 + $0x240] sm:$0xff]
        %v485 = vld [vmem:[%s308 + $0x248] sm:$0xff]
        %v486 = vld [vmem:[%s308 + $0x250] sm:$0xff]
        %v487 = vld [vmem:[%s308 + $0x258] sm:$0xff]
        %v488 = vld [vmem:[%s308 + $0x260] sm:$0xff]
        %v489 = vld [vmem:[%s308 + $0x268] sm:$0xff]
        %v490 = vld [vmem:[%s308 + $0x270] sm:$0xff]
        %v491 = vld [vmem:[%s308 + $0x278] sm:$0xff]
        %v492 = vld [vmem:[%s308 + $0x280] sm:$0xff]
        %v493 = vld [vmem:[%s308 + $0x288] sm:$0xff]
        %v494 = vld [vmem:[%s308 + $0x290] sm:$0xff]
        %v495 = vld [vmem:[%s308 + $0x298] sm:$0xff]
        %v496 = vld [vmem:[%s308 + $0x2a0] sm:$0xff]
        %v497 = vld [vmem:[%s308 + $0x2a8] sm:$0xff]
        %v498 = vld [vmem:[%s308 + $0x2b0] sm:$0xff]
        %v499 = vld [vmem:[%s308 + $0x2b8] sm:$0xff]
        %v500 = vld [vmem:[%s308 + $0x2c0] sm:$0xff]
        %v501 = vld [vmem:[%s308 + $0x2c8] sm:$0xff]
        %v502 = vld [vmem:[%s308 + $0x2d0] sm:$0xff]
        %v503 = vld [vmem:[%s308 + $0x2d8] sm:$0xff]
        %v504 = vld [vmem:[%s308 + $0x2e0] sm:$0xff]
        %v505 = vld [vmem:[%s308 + $0x2e8] sm:$0xff]
        %v506 = vld [vmem:[%s308 + $0x2f0] sm:$0xff]
        %v507 = vld [vmem:[%s308 + $0x2f8] sm:$0xff]
        %v508 = vld [vmem:[%s317] sm:$0xf]
        %v510 = vlaneseq
        %v511 = vshrl.u32 %v510, 7
        %v512 = vsub.s32 0, %v511
        %v513 = vrot.slane %v508, %v512
        %v514 = vlaneseq
        %v515 = vshrl.u32 %v514, 7
        %v516 = vsub.s32 1, %v515
        %v517 = vrot.slane %v508, %v516
        %v518 = vlaneseq
        %v519 = vshrl.u32 %v518, 7
        %v520 = vsub.s32 2, %v519
        %v521 = vrot.slane %v508, %v520
        %v522 = vlaneseq
        %v523 = vshrl.u32 %v522, 7
        %v524 = vsub.s32 3, %v523
        %v525 = vrot.slane %v508, %v524
        %v546 = vunpack.c.l.b16 %v396
        %v547 = vunpack.c.h.b16 %v396
        %v548 = vunpack.c.l.b16 %v397
        %v549 = vunpack.c.l.b16 %v398
        %v550 = vunpack.c.h.b16 %v398
        %v551 = vunpack.c.l.b16 %v399
        %v552 = vunpack.c.l.b16 %v400
        %v553 = vunpack.c.h.b16 %v400
        %v554 = vunpack.c.l.b16 %v401
        %v555 = vunpack.c.l.b16 %v402
        %v556 = vunpack.c.h.b16 %v402
        %v557 = vunpack.c.l.b16 %v403
        %v558 = vunpack.c.l.b16 %v404
        %v559 = vunpack.c.h.b16 %v404
        %v560 = vunpack.c.l.b16 %v405
        %v561 = vunpack.c.l.b16 %v406
        %v562 = vunpack.c.h.b16 %v406
        %v563 = vunpack.c.l.b16 %v407
        %v564 = vunpack.c.l.b16 %v408
        %v565 = vunpack.c.h.b16 %v408
        %v566 = vunpack.c.l.b16 %v409
        %v567 = vunpack.c.l.b16 %v410
        %v568 = vunpack.c.h.b16 %v410
        %v569 = vunpack.c.l.b16 %v411
        %v570 = vpack.c.b16 %v549, %v546
        %v571 = vpack.c.b16 %v550, %v547
        %v572 = vpack.c.b16 %v551, %v548
        %v573 = vpack.c.b16 %v555, %v552
        %v574 = vpack.c.b16 %v556, %v553
        %v575 = vpack.c.b16 %v557, %v554
        %v576 = vpack.c.b16 %v561, %v558
        %v577 = vpack.c.b16 %v562, %v559
        %v578 = vpack.c.b16 %v563, %v560
        %v579 = vpack.c.b16 %v567, %v564
        %v580 = vpack.c.b16 %v568, %v565
        %v581 = vpack.c.b16 %v569, %v566
        %v690 = vunpack.c.l.b16 %v412
        %v691 = vunpack.c.h.b16 %v412
        %v692 = vunpack.c.l.b16 %v413
        %v693 = vunpack.c.h.b16 %v413
        %v694 = vunpack.c.l.b16 %v414
        %v695 = vunpack.c.h.b16 %v414
        %v696 = vunpack.c.l.b16 %v415
        %v697 = vunpack.c.h.b16 %v415
        %v698 = vunpack.c.l.b16 %v416
        %v699 = vunpack.c.h.b16 %v416
        %v700 = vunpack.c.l.b16 %v417
        %v701 = vunpack.c.h.b16 %v417
        %v702 = vunpack.c.l.b16 %v418
        %v703 = vunpack.c.h.b16 %v418
        %v704 = vunpack.c.l.b16 %v419
        %v705 = vunpack.c.h.b16 %v419
        %v706 = vunpack.c.l.b16 %v420
        %v707 = vunpack.c.h.b16 %v420
        %v708 = vunpack.c.l.b16 %v421
        %v709 = vunpack.c.h.b16 %v421
        %v710 = vunpack.c.l.b16 %v422
        %v711 = vunpack.c.h.b16 %v422
        %v712 = vunpack.c.l.b16 %v423
        %v713 = vunpack.c.h.b16 %v423
        %v714 = vunpack.c.l.b16 %v424
        %v715 = vunpack.c.h.b16 %v424
        %v716 = vunpack.c.l.b16 %v425
        %v717 = vunpack.c.h.b16 %v425
        %v718 = vunpack.c.l.b16 %v426
        %v719 = vunpack.c.h.b16 %v426
        %v720 = vunpack.c.l.b16 %v427
        %v721 = vunpack.c.h.b16 %v427
        %v722 = vunpack.c.l.b16 %v428
        %v723 = vunpack.c.h.b16 %v428
        %v724 = vunpack.c.l.b16 %v429
        %v725 = vunpack.c.h.b16 %v429
        %v726 = vunpack.c.l.b16 %v430
        %v727 = vunpack.c.h.b16 %v430
        %v728 = vunpack.c.l.b16 %v431
        %v729 = vunpack.c.h.b16 %v431
        %v730 = vunpack.c.l.b16 %v432
        %v731 = vunpack.c.h.b16 %v432
        %v732 = vunpack.c.l.b16 %v433
        %v733 = vunpack.c.h.b16 %v433
        %v734 = vunpack.c.l.b16 %v434
        %v735 = vunpack.c.h.b16 %v434
        %v736 = vunpack.c.l.b16 %v435
        %v737 = vunpack.c.h.b16 %v435
        %v738 = vunpack.c.l.b16 %v436
        %v739 = vunpack.c.h.b16 %v436
        %v740 = vunpack.c.l.b16 %v437
        %v741 = vunpack.c.h.b16 %v437
        %v742 = vunpack.c.l.b16 %v438
        %v743 = vunpack.c.h.b16 %v438
        %v744 = vunpack.c.l.b16 %v439
        %v745 = vunpack.c.h.b16 %v439
        %v746 = vunpack.c.l.b16 %v440
        %v747 = vunpack.c.h.b16 %v440
        %v748 = vunpack.c.l.b16 %v441
        %v749 = vunpack.c.h.b16 %v441
        %v750 = vunpack.c.l.b16 %v442
        %v751 = vunpack.c.h.b16 %v442
        %v752 = vunpack.c.l.b16 %v443
        %v753 = vunpack.c.h.b16 %v443
        %v754 = vunpack.c.l.b16 %v444
        %v755 = vunpack.c.h.b16 %v444
        %v756 = vunpack.c.l.b16 %v445
        %v757 = vunpack.c.h.b16 %v445
        %v758 = vunpack.c.l.b16 %v446
        %v759 = vunpack.c.h.b16 %v446
        %v760 = vunpack.c.l.b16 %v447
        %v761 = vunpack.c.h.b16 %v447
        %v762 = vunpack.c.l.b16 %v448
        %v763 = vunpack.c.h.b16 %v448
        %v764 = vunpack.c.l.b16 %v449
        %v765 = vunpack.c.h.b16 %v449
        %v766 = vunpack.c.l.b16 %v450
        %v767 = vunpack.c.h.b16 %v450
        %v768 = vunpack.c.l.b16 %v451
        %v769 = vunpack.c.h.b16 %v451
        %v770 = vunpack.c.l.b16 %v452
        %v771 = vunpack.c.h.b16 %v452
        %v772 = vunpack.c.l.b16 %v453
        %v773 = vunpack.c.h.b16 %v453
        %v774 = vunpack.c.l.b16 %v454
        %v775 = vunpack.c.h.b16 %v454
        %v776 = vunpack.c.l.b16 %v455
        %v777 = vunpack.c.h.b16 %v455
        %v778 = vunpack.c.l.b16 %v456
        %v779 = vunpack.c.h.b16 %v456
        %v780 = vunpack.c.l.b16 %v457
        %v781 = vunpack.c.h.b16 %v457
        %v782 = vunpack.c.l.b16 %v458
        %v783 = vunpack.c.h.b16 %v458
        %v784 = vunpack.c.l.b16 %v459
        %v785 = vunpack.c.h.b16 %v459
        %v786 = vunpack.c.l.b16 %v460
        %v787 = vunpack.c.h.b16 %v460
        %v788 = vunpack.c.l.b16 %v461
        %v789 = vunpack.c.h.b16 %v461
        %v790 = vunpack.c.l.b16 %v462
        %v791 = vunpack.c.h.b16 %v462
        %v792 = vunpack.c.l.b16 %v463
        %v793 = vunpack.c.h.b16 %v463
        %v794 = vunpack.c.l.b16 %v464
        %v795 = vunpack.c.h.b16 %v464
        %v796 = vunpack.c.l.b16 %v465
        %v797 = vunpack.c.h.b16 %v465
        %v798 = vunpack.c.l.b16 %v466
        %v799 = vunpack.c.h.b16 %v466
        %v800 = vunpack.c.l.b16 %v467
        %v801 = vunpack.c.h.b16 %v467
        %v802 = vunpack.c.l.b16 %v468
        %v803 = vunpack.c.h.b16 %v468
        %v804 = vunpack.c.l.b16 %v469
        %v805 = vunpack.c.h.b16 %v469
        %v806 = vunpack.c.l.b16 %v470
        %v807 = vunpack.c.h.b16 %v470
        %v808 = vunpack.c.l.b16 %v471
        %v809 = vunpack.c.h.b16 %v471
        %v810 = vunpack.c.l.b16 %v472
        %v811 = vunpack.c.h.b16 %v472
        %v812 = vunpack.c.l.b16 %v473
        %v813 = vunpack.c.h.b16 %v473
        %v814 = vunpack.c.l.b16 %v474
        %v815 = vunpack.c.h.b16 %v474
        %v816 = vunpack.c.l.b16 %v475
        %v817 = vunpack.c.h.b16 %v475
        %v818 = vunpack.c.l.b16 %v476
        %v819 = vunpack.c.h.b16 %v476
        %v820 = vunpack.c.l.b16 %v477
        %v821 = vunpack.c.h.b16 %v477
        %v822 = vunpack.c.l.b16 %v478
        %v823 = vunpack.c.h.b16 %v478
        %v824 = vunpack.c.l.b16 %v479
        %v825 = vunpack.c.h.b16 %v479
        %v826 = vunpack.c.l.b16 %v480
        %v827 = vunpack.c.h.b16 %v480
        %v828 = vunpack.c.l.b16 %v481
        %v829 = vunpack.c.h.b16 %v481
        %v830 = vunpack.c.l.b16 %v482
        %v831 = vunpack.c.h.b16 %v482
        %v832 = vunpack.c.l.b16 %v483
        %v833 = vunpack.c.h.b16 %v483
        %v834 = vunpack.c.l.b16 %v484
        %v835 = vunpack.c.h.b16 %v484
        %v836 = vunpack.c.l.b16 %v485
        %v837 = vunpack.c.h.b16 %v485
        %v838 = vunpack.c.l.b16 %v486
        %v839 = vunpack.c.h.b16 %v486
        %v840 = vunpack.c.l.b16 %v487
        %v841 = vunpack.c.h.b16 %v487
        %v842 = vunpack.c.l.b16 %v488
        %v843 = vunpack.c.h.b16 %v488
        %v844 = vunpack.c.l.b16 %v489
        %v845 = vunpack.c.h.b16 %v489
        %v846 = vunpack.c.l.b16 %v490
        %v847 = vunpack.c.h.b16 %v490
        %v848 = vunpack.c.l.b16 %v491
        %v849 = vunpack.c.h.b16 %v491
        %v850 = vunpack.c.l.b16 %v492
        %v851 = vunpack.c.h.b16 %v492
        %v852 = vunpack.c.l.b16 %v493
        %v853 = vunpack.c.h.b16 %v493
        %v854 = vunpack.c.l.b16 %v494
        %v855 = vunpack.c.h.b16 %v494
        %v856 = vunpack.c.l.b16 %v495
        %v857 = vunpack.c.h.b16 %v495
        %v858 = vunpack.c.l.b16 %v496
        %v859 = vunpack.c.h.b16 %v496
        %v860 = vunpack.c.l.b16 %v497
        %v861 = vunpack.c.h.b16 %v497
        %v862 = vunpack.c.l.b16 %v498
        %v863 = vunpack.c.h.b16 %v498
        %v864 = vunpack.c.l.b16 %v499
        %v865 = vunpack.c.h.b16 %v499
        %v866 = vunpack.c.l.b16 %v500
        %v867 = vunpack.c.h.b16 %v500
        %v868 = vunpack.c.l.b16 %v501
        %v869 = vunpack.c.h.b16 %v501
        %v870 = vunpack.c.l.b16 %v502
        %v871 = vunpack.c.h.b16 %v502
        %v872 = vunpack.c.l.b16 %v503
        %v873 = vunpack.c.h.b16 %v503
        %v874 = vunpack.c.l.b16 %v504
        %v875 = vunpack.c.h.b16 %v504
        %v876 = vunpack.c.l.b16 %v505
        %v877 = vunpack.c.h.b16 %v505
        %v878 = vunpack.c.l.b16 %v506
        %v879 = vunpack.c.h.b16 %v506
        %v880 = vunpack.c.l.b16 %v507
        %v881 = vunpack.c.h.b16 %v507
        %v882 = vpack.c.b16 %v694, %v690
        %v883 = vpack.c.b16 %v695, %v691
        %v884 = vpack.c.b16 %v696, %v692
        %v885 = vpack.c.b16 %v697, %v693
        %v886 = vpack.c.b16 %v702, %v698
        %v887 = vpack.c.b16 %v703, %v699
        %v888 = vpack.c.b16 %v704, %v700
        %v889 = vpack.c.b16 %v705, %v701
        %v890 = vpack.c.b16 %v710, %v706
        %v891 = vpack.c.b16 %v711, %v707
        %v892 = vpack.c.b16 %v712, %v708
        %v893 = vpack.c.b16 %v713, %v709
        %v894 = vpack.c.b16 %v718, %v714
        %v895 = vpack.c.b16 %v719, %v715
        %v896 = vpack.c.b16 %v720, %v716
        %v897 = vpack.c.b16 %v721, %v717
        %v898 = vpack.c.b16 %v726, %v722
        %v899 = vpack.c.b16 %v727, %v723
        %v900 = vpack.c.b16 %v728, %v724
        %v901 = vpack.c.b16 %v729, %v725
        %v902 = vpack.c.b16 %v734, %v730
        %v903 = vpack.c.b16 %v735, %v731
        %v904 = vpack.c.b16 %v736, %v732
        %v905 = vpack.c.b16 %v737, %v733
        %v906 = vpack.c.b16 %v742, %v738
        %v907 = vpack.c.b16 %v743, %v739
        %v908 = vpack.c.b16 %v744, %v740
        %v909 = vpack.c.b16 %v745, %v741
        %v910 = vpack.c.b16 %v750, %v746
        %v911 = vpack.c.b16 %v751, %v747
        %v912 = vpack.c.b16 %v752, %v748
        %v913 = vpack.c.b16 %v753, %v749
        %v914 = vpack.c.b16 %v758, %v754
        %v915 = vpack.c.b16 %v759, %v755
        %v916 = vpack.c.b16 %v760, %v756
        %v917 = vpack.c.b16 %v761, %v757
        %v918 = vpack.c.b16 %v766, %v762
        %v919 = vpack.c.b16 %v767, %v763
        %v920 = vpack.c.b16 %v768, %v764
        %v921 = vpack.c.b16 %v769, %v765
        %v922 = vpack.c.b16 %v774, %v770
        %v923 = vpack.c.b16 %v775, %v771
        %v924 = vpack.c.b16 %v776, %v772
        %v925 = vpack.c.b16 %v777, %v773
        %v926 = vpack.c.b16 %v782, %v778
        %v927 = vpack.c.b16 %v783, %v779
        %v928 = vpack.c.b16 %v784, %v780
        %v929 = vpack.c.b16 %v785, %v781
        %v930 = vpack.c.b16 %v790, %v786
        %v931 = vpack.c.b16 %v791, %v787
        %v932 = vpack.c.b16 %v792, %v788
        %v933 = vpack.c.b16 %v793, %v789
        %v934 = vpack.c.b16 %v798, %v794
        %v935 = vpack.c.b16 %v799, %v795
        %v936 = vpack.c.b16 %v800, %v796
        %v937 = vpack.c.b16 %v801, %v797
        %v938 = vpack.c.b16 %v806, %v802
        %v939 = vpack.c.b16 %v807, %v803
        %v940 = vpack.c.b16 %v808, %v804
        %v941 = vpack.c.b16 %v809, %v805
        %v942 = vpack.c.b16 %v814, %v810
        %v943 = vpack.c.b16 %v815, %v811
        %v944 = vpack.c.b16 %v816, %v812
        %v945 = vpack.c.b16 %v817, %v813
        %v946 = vpack.c.b16 %v822, %v818
        %v947 = vpack.c.b16 %v823, %v819
        %v948 = vpack.c.b16 %v824, %v820
        %v949 = vpack.c.b16 %v825, %v821
        %v950 = vpack.c.b16 %v830, %v826
        %v951 = vpack.c.b16 %v831, %v827
        %v952 = vpack.c.b16 %v832, %v828
        %v953 = vpack.c.b16 %v833, %v829
        %v954 = vpack.c.b16 %v838, %v834
        %v955 = vpack.c.b16 %v839, %v835
        %v956 = vpack.c.b16 %v840, %v836
        %v957 = vpack.c.b16 %v841, %v837
        %v958 = vpack.c.b16 %v846, %v842
        %v959 = vpack.c.b16 %v847, %v843
        %v960 = vpack.c.b16 %v848, %v844
        %v961 = vpack.c.b16 %v849, %v845
        %v962 = vpack.c.b16 %v854, %v850
        %v963 = vpack.c.b16 %v855, %v851
        %v964 = vpack.c.b16 %v856, %v852
        %v965 = vpack.c.b16 %v857, %v853
        %v966 = vpack.c.b16 %v862, %v858
        %v967 = vpack.c.b16 %v863, %v859
        %v968 = vpack.c.b16 %v864, %v860
        %v969 = vpack.c.b16 %v865, %v861
        %v970 = vpack.c.b16 %v870, %v866
        %v971 = vpack.c.b16 %v871, %v867
        %v972 = vpack.c.b16 %v872, %v868
        %v973 = vpack.c.b16 %v873, %v869
        %v974 = vpack.c.b16 %v878, %v874
        %v975 = vpack.c.b16 %v879, %v875
        %v976 = vpack.c.b16 %v880, %v876
        %v977 = vpack.c.b16 %v881, %v877
        %1074 = vmatprep.subr.bf16.mxu0 %v883
        %1075 = vmatpush1.bf16.msra.mxu0 %v882
        %1076 = vmatprep.subr.bf16.mxu0 %v887
        %1077 = vmatpush1.bf16.msra.mxu0 %v886
        %1078 = vmatprep.subr.bf16.mxu0 %v891
        %1079 = vmatpush1.bf16.msra.mxu0 %v890
        %1080 = vmatprep.subr.bf16.mxu0 %v895
        %1081 = vmatpush1.bf16.msra.mxu0 %v894
        %1082 = vmatprep.subr.bf16.mxu0 %v899
        %1083 = vmatpush1.bf16.msra.mxu0 %v898
        %1084 = vmatprep.subr.bf16.mxu0 %v903
        %1085 = vmatpush1.bf16.msra.mxu0 %v902
        %1086 = vmatprep.subr.bf16.mxu0 %v907
        %1087 = vmatpush1.bf16.msra.mxu0 %v906
        %1088 = vmatprep.subr.bf16.mxu0 %v911
        %1089 = vmatpush1.bf16.msra.mxu0 %v910
        %1090 = vmatprep.subr.bf16.mxu0 %v915
        %1091 = vmatpush1.bf16.msra.mxu0 %v914
        %1092 = vmatprep.subr.bf16.mxu0 %v919
        %1093 = vmatpush1.bf16.msra.mxu0 %v918
        %1094 = vmatprep.subr.bf16.mxu0 %v923
        %1095 = vmatpush1.bf16.msra.mxu0 %v922
        %1096 = vmatprep.subr.bf16.mxu0 %v927
        %1097 = vmatpush1.bf16.msra.mxu0 %v926
        %1098 = vmatprep.subr.bf16.mxu0 %v931
        %1099 = vmatpush1.bf16.msra.mxu0 %v930
        %1100 = vmatprep.subr.bf16.mxu0 %v935
        %1101 = vmatpush1.bf16.msra.mxu0 %v934
        %1102 = vmatprep.subr.bf16.mxu0 %v939
        %1103 = vmatpush1.bf16.msra.mxu0 %v938
        %1104 = vmatprep.subr.bf16.mxu0 %v943
        %1105 = vmatpush1.bf16.msra.mxu0 %v942
        %1106 = vmatprep.mubr.bf16.mxu0 %v571
        %1107 = vmatmul.mubr.bf16.gmra.mrb[0].mxu0 %v570
        %v1108 = vpop.f32.mrb[0].mxu0
        %v1109 = vadd.f32 %v513, %v1108
        %v1110 = vpop.f32.mrb[0].mxu0
        %v1111 = vadd.f32 %v517, %v1110
        %v1112 = vpop.f32.mrb[0].mxu0
        %v1113 = vadd.f32 %v513, %v1112
        %v1114 = vpop.f32.mrb[0].mxu0
        %v1115 = vadd.f32 %v517, %v1114
        %1116 = vmatprep.mubr.bf16.mxu0 %v574
        %1117 = vmatmul.mubr.bf16.gmra.mrb[0].mxu0 %v573
        %v1118 = vpop.f32.mrb[0].mxu0
        %v1119 = vadd.f32 %v513, %v1118
        %v1120 = vpop.f32.mrb[0].mxu0
        %v1121 = vadd.f32 %v517, %v1120
        %v1122 = vpop.f32.mrb[0].mxu0
        %v1123 = vadd.f32 %v513, %v1122
        %v1124 = vpop.f32.mrb[0].mxu0
        %v1125 = vadd.f32 %v517, %v1124
        %1126 = vmatprep.mubr.bf16.mxu0 %v577
        %1127 = vmatmul.mubr.bf16.gmra.mrb[0].mxu0 %v576
        %v1128 = vpop.f32.mrb[0].mxu0
        %v1129 = vadd.f32 %v513, %v1128
        %v1130 = vpop.f32.mrb[0].mxu0
        %v1131 = vadd.f32 %v517, %v1130
        %v1132 = vpop.f32.mrb[0].mxu0
        %v1133 = vadd.f32 %v513, %v1132
        %v1134 = vpop.f32.mrb[0].mxu0
        %v1135 = vadd.f32 %v517, %v1134
        %1136 = vmatprep.mubr.bf16.mxu0 %v580
        %1137 = vmatmul.mubr.bf16.gmra.mrb[0].mxu0 %v579
        %v1138 = vpop.f32.mrb[0].mxu0
        %v1139 = vadd.f32 %v513, %v1138
        %v1140 = vpop.f32.mrb[0].mxu0
        %v1141 = vadd.f32 %v517, %v1140
        %v1142 = vpop.f32.mrb[0].mxu0
        %v1143 = vadd.f32 %v513, %v1142
        %v1144 = vpop.f32.mrb[0].mxu0
        %v1145 = vadd.f32 %v517, %v1144
        %1146 = vdwg.mxu0
        %1147 = vmatprep.subr.bf16.mxu0 %v947
        %1148 = vmatpush1.bf16.msra.mxu0 %v946
        %1149 = vmatprep.subr.bf16.mxu0 %v951
        %1150 = vmatpush1.bf16.msra.mxu0 %v950
        %1151 = vmatprep.subr.bf16.mxu0 %v955
        %1152 = vmatpush1.bf16.msra.mxu0 %v954
        %1153 = vmatprep.subr.bf16.mxu0 %v959
        %1154 = vmatpush1.bf16.msra.mxu0 %v958
        %1155 = vmatprep.subr.bf16.mxu0 %v963
        %1156 = vmatpush1.bf16.msra.mxu0 %v962
        %1157 = vmatprep.subr.bf16.mxu0 %v967
        %1158 = vmatpush1.bf16.msra.mxu0 %v966
        %1159 = vmatprep.subr.bf16.mxu0 %v971
        %1160 = vmatpush1.bf16.msra.mxu0 %v970
        %1161 = vmatprep.subr.bf16.mxu0 %v975
        %1162 = vmatpush1.bf16.msra.mxu0 %v974
        %1163 = vmatprep.subr.bf16.mxu0 0
        %1164 = vmatpush1.bf16.msra.mxu0 0
        %1165 = vmatprep.subr.bf16.mxu0 0
        %1166 = vmatpush1.bf16.msra.mxu0 0
        %1167 = vmatprep.subr.bf16.mxu0 0
        %1168 = vmatpush1.bf16.msra.mxu0 0
        %1169 = vmatprep.subr.bf16.mxu0 0
        %1170 = vmatpush1.bf16.msra.mxu0 0
        %1171 = vmatprep.subr.bf16.mxu0 0
        %1172 = vmatpush1.bf16.msra.mxu0 0
        %1173 = vmatprep.subr.bf16.mxu0 0
        %1174 = vmatpush1.bf16.msra.mxu0 0
        %1175 = vmatprep.subr.bf16.mxu0 0
        %1176 = vmatpush1.bf16.msra.mxu0 0
        %1177 = vmatprep.subr.bf16.mxu0 0
        %1178 = vmatpush1.bf16.msra.mxu0 0
        %1179 = vmatprep.mubr.bf16.mxu0 0
        %1180 = vmatmul.mubr.bf16.gmra.mrb[0].mxu0 %v572
        %v1181 = vpop.f32.mrb[0].mxu0
        %v1182 = vadd.f32 %v1109, %v1181
        %v1183 = vpop.f32.mrb[0].mxu0
        %v1184 = vadd.f32 %v1111, %v1183
        %v1185 = vpop.f32.mrb[0].mxu0
        %v1186 = vadd.f32 %v1113, %v1185
        %v1187 = vpop.f32.mrb[0].mxu0
        %v1188 = vadd.f32 %v1115, %v1187
        %1189 = vmatprep.mubr.bf16.mxu0 0
        %1190 = vmatmul.mubr.bf16.gmra.mrb[0].mxu0 %v575
        %v1191 = vpop.f32.mrb[0].mxu0
        %v1192 = vadd.f32 %v1119, %v1191
        %v1193 = vpop.f32.mrb[0].mxu0
        %v1194 = vadd.f32 %v1121, %v1193
        %v1195 = vpop.f32.mrb[0].mxu0
        %v1196 = vadd.f32 %v1123, %v1195
        %v1197 = vpop.f32.mrb[0].mxu0
        %v1198 = vadd.f32 %v1125, %v1197
        %1199 = vmatprep.mubr.bf16.mxu0 0
        %1200 = vmatmul.mubr.bf16.gmra.mrb[0].mxu0 %v578
        %v1201 = vpop.f32.mrb[0].mxu0
        %v1202 = vadd.f32 %v1129, %v1201
        %v1203 = vpop.f32.mrb[0].mxu0
        %v1204 = vadd.f32 %v1131, %v1203
        %v1205 = vpop.f32.mrb[0].mxu0
        %v1206 = vadd.f32 %v1133, %v1205
        %v1207 = vpop.f32.mrb[0].mxu0
        %v1208 = vadd.f32 %v1135, %v1207
        %1209 = vmatprep.mubr.bf16.mxu0 0
        %1210 = vmatmul.mubr.bf16.gmra.mrb[0].mxu0 %v581
        %v1211 = vpop.f32.mrb[0].mxu0
        %v1212 = vadd.f32 %v1139, %v1211
        %v1213 = vpop.f32.mrb[0].mxu0
        %v1214 = vadd.f32 %v1141, %v1213
        %v1215 = vpop.f32.mrb[0].mxu0
        %v1216 = vadd.f32 %v1143, %v1215
        %v1217 = vpop.f32.mrb[0].mxu0
        %v1218 = vadd.f32 %v1145, %v1217
        %1219 = vdwg.mxu0
        %1220 = vmatprep.subr.bf16.mxu0 %v885
        %1221 = vmatpush1.bf16.msra.mxu0 %v884
        %1222 = vmatprep.subr.bf16.mxu0 %v889
        %1223 = vmatpush1.bf16.msra.mxu0 %v888
        %1224 = vmatprep.subr.bf16.mxu0 %v893
        %1225 = vmatpush1.bf16.msra.mxu0 %v892
        %1226 = vmatprep.subr.bf16.mxu0 %v897
        %1227 = vmatpush1.bf16.msra.mxu0 %v896
        %1228 = vmatprep.subr.bf16.mxu0 %v901
        %1229 = vmatpush1.bf16.msra.mxu0 %v900
        %1230 = vmatprep.subr.bf16.mxu0 %v905
        %1231 = vmatpush1.bf16.msra.mxu0 %v904
        %1232 = vmatprep.subr.bf16.mxu0 %v909
        %1233 = vmatpush1.bf16.msra.mxu0 %v908
        %1234 = vmatprep.subr.bf16.mxu0 %v913
        %1235 = vmatpush1.bf16.msra.mxu0 %v912
        %1236 = vmatprep.subr.bf16.mxu0 %v917
        %1237 = vmatpush1.bf16.msra.mxu0 %v916
        %1238 = vmatprep.subr.bf16.mxu0 %v921
        %1239 = vmatpush1.bf16.msra.mxu0 %v920
        %1240 = vmatprep.subr.bf16.mxu0 %v925
        %1241 = vmatpush1.bf16.msra.mxu0 %v924
        %1242 = vmatprep.subr.bf16.mxu0 %v929
        %1243 = vmatpush1.bf16.msra.mxu0 %v928
        %1244 = vmatprep.subr.bf16.mxu0 %v933
        %1245 = vmatpush1.bf16.msra.mxu0 %v932
        %1246 = vmatprep.subr.bf16.mxu0 %v937
        %1247 = vmatpush1.bf16.msra.mxu0 %v936
        %1248 = vmatprep.subr.bf16.mxu0 %v941
        %1249 = vmatpush1.bf16.msra.mxu0 %v940
        %1250 = vmatprep.subr.bf16.mxu0 %v945
        %1251 = vmatpush1.bf16.msra.mxu0 %v944
        %1252 = vmatprep.mubr.bf16.mxu0 %v571
        %1253 = vmatmul.mubr.bf16.gmra.mrb[0].mxu0 %v570
        %v1254 = vpop.f32.mrb[0].mxu0
        %v1255 = vadd.f32 %v521, %v1254
        %v1256 = vpop.f32.mrb[0].mxu0
        %v1257 = vadd.f32 %v525, %v1256
        %v1258 = vpop.f32.mrb[0].mxu0
        %v1259 = vadd.f32 %v521, %v1258
        %v1260 = vpop.f32.mrb[0].mxu0
        %v1261 = vadd.f32 %v525, %v1260
        %1262 = vmatprep.mubr.bf16.mxu0 %v574
        %1263 = vmatmul.mubr.bf16.gmra.mrb[0].mxu0 %v573
        %v1264 = vpop.f32.mrb[0].mxu0
        %v1265 = vadd.f32 %v521, %v1264
        %v1266 = vpop.f32.mrb[0].mxu0
        %v1267 = vadd.f32 %v525, %v1266
        %v1268 = vpop.f32.mrb[0].mxu0
        %v1269 = vadd.f32 %v521, %v1268
        %v1270 = vpop.f32.mrb[0].mxu0
        %v1271 = vadd.f32 %v525, %v1270
        %1272 = vmatprep.mubr.bf16.mxu0 %v577
        %1273 = vmatmul.mubr.bf16.gmra.mrb[0].mxu0 %v576
        %v1274 = vpop.f32.mrb[0].mxu0
        %v1275 = vadd.f32 %v521, %v1274
        %v1276 = vpop.f32.mrb[0].mxu0
        %v1277 = vadd.f32 %v525, %v1276
        %v1278 = vpop.f32.mrb[0].mxu0
        %v1279 = vadd.f32 %v521, %v1278
        %v1280 = vpop.f32.mrb[0].mxu0
        %v1281 = vadd.f32 %v525, %v1280
        %1282 = vmatprep.mubr.bf16.mxu0 %v580
        %1283 = vmatmul.mubr.bf16.gmra.mrb[0].mxu0 %v579
        %v1284 = vpop.f32.mrb[0].mxu0
        %v1285 = vadd.f32 %v521, %v1284
        %v1286 = vpop.f32.mrb[0].mxu0
        %v1287 = vadd.f32 %v525, %v1286
        %v1288 = vpop.f32.mrb[0].mxu0
        %v1289 = vadd.f32 %v521, %v1288
        %v1290 = vpop.f32.mrb[0].mxu0
        %v1291 = vadd.f32 %v525, %v1290
        %1292 = vdwg.mxu0
        %1293 = vmatprep.subr.bf16.mxu0 %v949
        %1294 = vmatpush1.bf16.msra.mxu0 %v948
        %1295 = vmatprep.subr.bf16.mxu0 %v953
        %1296 = vmatpush1.bf16.msra.mxu0 %v952
        %1297 = vmatprep.subr.bf16.mxu0 %v957
        %1298 = vmatpush1.bf16.msra.mxu0 %v956
        %1299 = vmatprep.subr.bf16.mxu0 %v961
        %1300 = vmatpush1.bf16.msra.mxu0 %v960
        %1301 = vmatprep.subr.bf16.mxu0 %v965
        %1302 = vmatpush1.bf16.msra.mxu0 %v964
        %1303 = vmatprep.subr.bf16.mxu0 %v969
        %1304 = vmatpush1.bf16.msra.mxu0 %v968
        %1305 = vmatprep.subr.bf16.mxu0 %v973
        %1306 = vmatpush1.bf16.msra.mxu0 %v972
        %1307 = vmatprep.subr.bf16.mxu0 %v977
        %1308 = vmatpush1.bf16.msra.mxu0 %v976
        %1309 = vmatprep.subr.bf16.mxu0 0
        %1310 = vmatpush1.bf16.msra.mxu0 0
        %1311 = vmatprep.subr.bf16.mxu0 0
        %1312 = vmatpush1.bf16.msra.mxu0 0
        %1313 = vmatprep.subr.bf16.mxu0 0
        %1314 = vmatpush1.bf16.msra.mxu0 0
        %1315 = vmatprep.subr.bf16.mxu0 0
        %1316 = vmatpush1.bf16.msra.mxu0 0
        %1317 = vmatprep.subr.bf16.mxu0 0
        %1318 = vmatpush1.bf16.msra.mxu0 0
        %1319 = vmatprep.subr.bf16.mxu0 0
        %1320 = vmatpush1.bf16.msra.mxu0 0
        %1321 = vmatprep.subr.bf16.mxu0 0
        %1322 = vmatpush1.bf16.msra.mxu0 0
        %1323 = vmatprep.subr.bf16.mxu0 0
        %1324 = vmatpush1.bf16.msra.mxu0 0
        %1325 = vmatprep.mubr.bf16.mxu0 0
        %1326 = vmatmul.mubr.bf16.gmra.mrb[0].mxu0 %v572
        %v1327 = vpop.f32.mrb[0].mxu0
        %v1328 = vadd.f32 %v1255, %v1327
        %v1329 = vpop.f32.mrb[0].mxu0
        %v1330 = vadd.f32 %v1257, %v1329
        %v1331 = vpop.f32.mrb[0].mxu0
        %v1332 = vadd.f32 %v1259, %v1331
        %v1333 = vpop.f32.mrb[0].mxu0
        %v1334 = vadd.f32 %v1261, %v1333
        %1335 = vmatprep.mubr.bf16.mxu0 0
        %1336 = vmatmul.mubr.bf16.gmra.mrb[0].mxu0 %v575
        %v1337 = vpop.f32.mrb[0].mxu0
        %v1338 = vadd.f32 %v1265, %v1337
        %v1339 = vpop.f32.mrb[0].mxu0
        %v1340 = vadd.f32 %v1267, %v1339
        %v1341 = vpop.f32.mrb[0].mxu0
        %v1342 = vadd.f32 %v1269, %v1341
        %v1343 = vpop.f32.mrb[0].mxu0
        %v1344 = vadd.f32 %v1271, %v1343
        %1345 = vmatprep.mubr.bf16.mxu0 0
        %1346 = vmatmul.mubr.bf16.gmra.mrb[0].mxu0 %v578
        %v1347 = vpop.f32.mrb[0].mxu0
        %v1348 = vadd.f32 %v1275, %v1347
        %v1349 = vpop.f32.mrb[0].mxu0
        %v1350 = vadd.f32 %v1277, %v1349
        %v1351 = vpop.f32.mrb[0].mxu0
        %v1352 = vadd.f32 %v1279, %v1351
        %v1353 = vpop.f32.mrb[0].mxu0
        %v1354 = vadd.f32 %v1281, %v1353
        %1355 = vmatprep.mubr.bf16.mxu0 0
        %1356 = vmatmul.mubr.bf16.gmra.mrb[0].mxu0 %v581
        %v1357 = vpop.f32.mrb[0].mxu0
        %v1358 = vadd.f32 %v1285, %v1357
        %v1359 = vpop.f32.mrb[0].mxu0
        %v1360 = vadd.f32 %v1287, %v1359
        %v1361 = vpop.f32.mrb[0].mxu0
        %v1362 = vadd.f32 %v1289, %v1361
        %v1363 = vpop.f32.mrb[0].mxu0
        %v1364 = vadd.f32 %v1291, %v1363
        %1365 = vdwg.mxu0
        %v1366 = vmax.f32 %v1182, 0.0
        %v1367 = vmax.f32 %v1184, 0.0
        %v1368 = vmax.f32 %v1328, 0.0
        %v1369 = vmax.f32 %v1330, 0.0
        %v1370 = vmax.f32 %v1186, 0.0
        %v1371 = vmax.f32 %v1188, 0.0
        %v1372 = vmax.f32 %v1332, 0.0
        %v1373 = vmax.f32 %v1334, 0.0
        %v1374 = vmax.f32 %v1192, 0.0
        %v1375 = vmax.f32 %v1194, 0.0
        %v1376 = vmax.f32 %v1338, 0.0
        %v1377 = vmax.f32 %v1340, 0.0
        %v1378 = vmax.f32 %v1196, 0.0
        %v1379 = vmax.f32 %v1198, 0.0
        %v1380 = vmax.f32 %v1342, 0.0
        %v1381 = vmax.f32 %v1344, 0.0
        %v1382 = vmax.f32 %v1202, 0.0
        %v1383 = vmax.f32 %v1204, 0.0
        %v1384 = vmax.f32 %v1348, 0.0
        %v1385 = vmax.f32 %v1350, 0.0
        %v1386 = vmax.f32 %v1206, 0.0
        %v1387 = vmax.f32 %v1208, 0.0
        %v1388 = vmax.f32 %v1352, 0.0
        %v1389 = vmax.f32 %v1354, 0.0
        %v1390 = vmax.f32 %v1212, 0.0
        %v1391 = vmax.f32 %v1214, 0.0
        %v1392 = vmax.f32 %v1358, 0.0
        %v1393 = vmax.f32 %v1360, 0.0
        %v1394 = vmax.f32 %v1216, 0.0
        %v1395 = vmax.f32 %v1218, 0.0
        %v1396 = vmax.f32 %v1362, 0.0
        %v1397 = vmax.f32 %v1364, 0.0
        %v1398 = vld [vmem:[#allocation2] sm:$0xff]
        %v1399 = vld [vmem:[#allocation2 + $0x8] sm:$0xff]
        %v1400 = vld [vmem:[#allocation2 + $0x10] sm:$0xff]
        %v1401 = vld [vmem:[#allocation2 + $0x18] sm:$0xff]
        %v1402 = vld [vmem:[#allocation2 + $0x20] sm:$0xff]
        %v1403 = vld [vmem:[#allocation2 + $0x28] sm:$0xff]
        %v1404 = vld [vmem:[#allocation2 + $0x30] sm:$0xff]
        %v1405 = vld [vmem:[#allocation2 + $0x38] sm:$0xff]
        %v1406 = vld [vmem:[#allocation2 + $0x40] sm:$0xff]
        %v1407 = vld [vmem:[#allocation2 + $0x48] sm:$0xff]
        %v1408 = vld [vmem:[#allocation2 + $0x50] sm:$0xff]
        %v1409 = vld [vmem:[#allocation2 + $0x58] sm:$0xff]
        %v1410 = vld [vmem:[#allocation2 + $0x60] sm:$0xff]
        %v1411 = vld [vmem:[#allocation2 + $0x68] sm:$0xff]
        %v1412 = vld [vmem:[#allocation2 + $0x70] sm:$0xff]
        %v1413 = vld [vmem:[#allocation2 + $0x78] sm:$0xff]
        %v1414 = vld [vmem:[#allocation2 + $0x80] sm:$0xff]
        %v1415 = vld [vmem:[#allocation2 + $0x88] sm:$0xff]
        %v1416 = vld [vmem:[#allocation2 + $0x90] sm:$0xff]
        %v1417 = vld [vmem:[#allocation2 + $0x98] sm:$0xff]
        %v1418 = vld [vmem:[#allocation2 + $0xa0] sm:$0xff]
        %v1419 = vld [vmem:[#allocation2 + $0xa8] sm:$0xff]
        %v1420 = vld [vmem:[#allocation2 + $0xb0] sm:$0xff]
        %v1421 = vld [vmem:[#allocation2 + $0xb8] sm:$0xff]
        %v1422 = vpack.c.bf16 %v1370, %v1366
        %v1423 = vpack.c.bf16 %v1371, %v1367
        %v1424 = vpack.c.bf16 %v1372, %v1368
        %v1425 = vpack.c.bf16 %v1373, %v1369
        %v1426 = vpack.c.bf16 %v1378, %v1374
        %v1427 = vpack.c.bf16 %v1379, %v1375
        %v1428 = vpack.c.bf16 %v1380, %v1376
        %v1429 = vpack.c.bf16 %v1381, %v1377
        %v1430 = vpack.c.bf16 %v1386, %v1382
        %v1431 = vpack.c.bf16 %v1387, %v1383
        %v1432 = vpack.c.bf16 %v1388, %v1384
        %v1433 = vpack.c.bf16 %v1389, %v1385
        %v1434 = vpack.c.bf16 %v1394, %v1390
        %v1435 = vpack.c.bf16 %v1395, %v1391
        %v1436 = vpack.c.bf16 %v1396, %v1392
        %v1437 = vpack.c.bf16 %v1397, %v1393
        %v1438 = vld [vmem:[%s326] sm:$0xff]
        %v1439 = vld [vmem:[%s326 + $0x8] sm:$0xf]
        %v1440 = vld [vmem:[%s326 + $0xc] sm:$0xff]
        %v1441 = vld [vmem:[%s326 + $0x14] sm:$0xf]
        %v1442 = vld [vmem:[%s326 + $0x18] sm:$0xff]
        %v1443 = vld [vmem:[%s326 + $0x20] sm:$0xf]
        %v1444 = vld [vmem:[%s326 + $0x24] sm:$0xff]
        %v1445 = vld [vmem:[%s326 + $0x2c] sm:$0xf]
        %v1446 = vld [vmem:[%s326 + $0x30] sm:$0xff]
        %v1447 = vld [vmem:[%s326 + $0x38] sm:$0xf]
        %v1448 = vld [vmem:[%s326 + $0x3c] sm:$0xff]
        %v1449 = vld [vmem:[%s326 + $0x44] sm:$0xf]
        %v1450 = vld [vmem:[%s326 + $0x48] sm:$0xff]
        %v1451 = vld [vmem:[%s326 + $0x50] sm:$0xf]
        %v1452 = vld [vmem:[%s326 + $0x54] sm:$0xff]
        %v1453 = vld [vmem:[%s326 + $0x5c] sm:$0xf]
        %v1454 = vld [vmem:[%s326 + $0x60] sm:$0xff]
        %v1455 = vld [vmem:[%s326 + $0x68] sm:$0xf]
        %v1456 = vld [vmem:[%s326 + $0x6c] sm:$0xff]
        %v1457 = vld [vmem:[%s326 + $0x74] sm:$0xf]
        %v1458 = vld [vmem:[%s326 + $0x78] sm:$0xff]
        %v1459 = vld [vmem:[%s326 + $0x80] sm:$0xf]
        %v1460 = vld [vmem:[%s326 + $0x84] sm:$0xff]
        %v1461 = vld [vmem:[%s326 + $0x8c] sm:$0xf]
        %v1462 = vld [vmem:[%s326 + $0x90] sm:$0xff]
        %v1463 = vld [vmem:[%s326 + $0x98] sm:$0xf]
        %v1464 = vld [vmem:[%s326 + $0x9c] sm:$0xff]
        %v1465 = vld [vmem:[%s326 + $0xa4] sm:$0xf]
        %v1466 = vld [vmem:[%s326 + $0xa8] sm:$0xff]
        %v1467 = vld [vmem:[%s326 + $0xb0] sm:$0xf]
        %v1468 = vld [vmem:[%s326 + $0xb4] sm:$0xff]
        %v1469 = vld [vmem:[%s326 + $0xbc] sm:$0xf]
        %v1470 = vld [vmem:[%s326 + $0xc0] sm:$0xff]
        %v1471 = vld [vmem:[%s326 + $0xc8] sm:$0xf]
        %v1472 = vld [vmem:[%s326 + $0xcc] sm:$0xff]
        %v1473 = vld [vmem:[%s326 + $0xd4] sm:$0xf]
        %v1474 = vld [vmem:[%s326 + $0xd8] sm:$0xff]
        %v1475 = vld [vmem:[%s326 + $0xe0] sm:$0xf]
        %v1476 = vld [vmem:[%s326 + $0xe4] sm:$0xff]
        %v1477 = vld [vmem:[%s326 + $0xec] sm:$0xf]
        %v1478 = vld [vmem:[%s326 + $0xf0] sm:$0xff]
        %v1479 = vld [vmem:[%s326 + $0xf8] sm:$0xf]
        %v1480 = vld [vmem:[%s326 + $0xfc] sm:$0xff]
        %v1481 = vld [vmem:[%s326 + $0x104] sm:$0xf]
        %v1482 = vld [vmem:[%s326 + $0x108] sm:$0xff]
        %v1483 = vld [vmem:[%s326 + $0x110] sm:$0xf]
        %v1484 = vld [vmem:[%s326 + $0x114] sm:$0xff]
        %v1485 = vld [vmem:[%s326 + $0x11c] sm:$0xf]
        %v1486 = vld [vmem:[%s326 + $0x120] sm:$0xff]
        %v1487 = vld [vmem:[%s326 + $0x128] sm:$0xf]
        %v1488 = vld [vmem:[%s326 + $0x12c] sm:$0xff]
        %v1489 = vld [vmem:[%s326 + $0x134] sm:$0xf]
        %v1490 = vld [vmem:[%s326 + $0x138] sm:$0xff]
        %v1491 = vld [vmem:[%s326 + $0x140] sm:$0xf]
        %v1492 = vld [vmem:[%s326 + $0x144] sm:$0xff]
        %v1493 = vld [vmem:[%s326 + $0x14c] sm:$0xf]
        %v1494 = vld [vmem:[%s326 + $0x150] sm:$0xff]
        %v1495 = vld [vmem:[%s326 + $0x158] sm:$0xf]
        %v1496 = vld [vmem:[%s326 + $0x15c] sm:$0xff]
        %v1497 = vld [vmem:[%s326 + $0x164] sm:$0xf]
        %v1498 = vld [vmem:[%s326 + $0x168] sm:$0xff]
        %v1499 = vld [vmem:[%s326 + $0x170] sm:$0xf]
        %v1500 = vld [vmem:[%s326 + $0x174] sm:$0xff]
        %v1501 = vld [vmem:[%s326 + $0x17c] sm:$0xf]
        %v1502 = vld [vmem:[%s326 + $0x180] sm:$0xff]
        %v1503 = vld [vmem:[%s326 + $0x188] sm:$0xf]
        %v1504 = vld [vmem:[%s326 + $0x18c] sm:$0xff]
        %v1505 = vld [vmem:[%s326 + $0x194] sm:$0xf]
        %v1506 = vld [vmem:[%s326 + $0x198] sm:$0xff]
        %v1507 = vld [vmem:[%s326 + $0x1a0] sm:$0xf]
        %v1508 = vld [vmem:[%s326 + $0x1a4] sm:$0xff]
        %v1509 = vld [vmem:[%s326 + $0x1ac] sm:$0xf]
        %v1510 = vld [vmem:[%s326 + $0x1b0] sm:$0xff]
        %v1511 = vld [vmem:[%s326 + $0x1b8] sm:$0xf]
        %v1512 = vld [vmem:[%s326 + $0x1bc] sm:$0xff]
        %v1513 = vld [vmem:[%s326 + $0x1c4] sm:$0xf]
        %v1514 = vld [vmem:[%s326 + $0x1c8] sm:$0xff]
        %v1515 = vld [vmem:[%s326 + $0x1d0] sm:$0xf]
        %v1516 = vld [vmem:[%s326 + $0x1d4] sm:$0xff]
        %v1517 = vld [vmem:[%s326 + $0x1dc] sm:$0xf]
        %v1518 = vld [vmem:[%s326 + $0x1e0] sm:$0xff]
        %v1519 = vld [vmem:[%s326 + $0x1e8] sm:$0xf]
        %v1520 = vld [vmem:[%s326 + $0x1ec] sm:$0xff]
        %v1521 = vld [vmem:[%s326 + $0x1f4] sm:$0xf]
        %v1522 = vld [vmem:[%s326 + $0x1f8] sm:$0xff]
        %v1523 = vld [vmem:[%s326 + $0x200] sm:$0xf]
        %v1524 = vld [vmem:[%s326 + $0x204] sm:$0xff]
        %v1525 = vld [vmem:[%s326 + $0x20c] sm:$0xf]
        %v1526 = vld [vmem:[%s326 + $0x210] sm:$0xff]
        %v1527 = vld [vmem:[%s326 + $0x218] sm:$0xf]
        %v1528 = vld [vmem:[%s326 + $0x21c] sm:$0xff]
        %v1529 = vld [vmem:[%s326 + $0x224] sm:$0xf]
        %v1530 = vld [vmem:[%s326 + $0x228] sm:$0xff]
        %v1531 = vld [vmem:[%s326 + $0x230] sm:$0xf]
        %v1532 = vld [vmem:[%s326 + $0x234] sm:$0xff]
        %v1533 = vld [vmem:[%s326 + $0x23c] sm:$0xf]
        %v1534 = vld [vmem:[%s326 + $0x240] sm:$0xff]
        %v1535 = vld [vmem:[%s326 + $0x248] sm:$0xf]
        %v1536 = vld [vmem:[%s326 + $0x24c] sm:$0xff]
        %v1537 = vld [vmem:[%s326 + $0x254] sm:$0xf]
        %v1538 = vld [vmem:[%s326 + $0x258] sm:$0xff]
        %v1539 = vld [vmem:[%s326 + $0x260] sm:$0xf]
        %v1540 = vld [vmem:[%s326 + $0x264] sm:$0xff]
        %v1541 = vld [vmem:[%s326 + $0x26c] sm:$0xf]
        %v1542 = vld [vmem:[%s326 + $0x270] sm:$0xff]
        %v1543 = vld [vmem:[%s326 + $0x278] sm:$0xf]
        %v1544 = vld [vmem:[%s326 + $0x27c] sm:$0xff]
        %v1545 = vld [vmem:[%s326 + $0x284] sm:$0xf]
        %v1546 = vld [vmem:[%s326 + $0x288] sm:$0xff]
        %v1547 = vld [vmem:[%s326 + $0x290] sm:$0xf]
        %v1548 = vld [vmem:[%s326 + $0x294] sm:$0xff]
        %v1549 = vld [vmem:[%s326 + $0x29c] sm:$0xf]
        %v1550 = vld [vmem:[%s326 + $0x2a0] sm:$0xff]
        %v1551 = vld [vmem:[%s326 + $0x2a8] sm:$0xf]
        %v1552 = vld [vmem:[%s326 + $0x2ac] sm:$0xff]
        %v1553 = vld [vmem:[%s326 + $0x2b4] sm:$0xf]
        %v1554 = vld [vmem:[%s326 + $0x2b8] sm:$0xff]
        %v1555 = vld [vmem:[%s326 + $0x2c0] sm:$0xf]
        %v1556 = vld [vmem:[%s326 + $0x2c4] sm:$0xff]
        %v1557 = vld [vmem:[%s326 + $0x2cc] sm:$0xf]
        %v1558 = vld [vmem:[%s326 + $0x2d0] sm:$0xff]
        %v1559 = vld [vmem:[%s326 + $0x2d8] sm:$0xf]
        %v1560 = vld [vmem:[%s326 + $0x2dc] sm:$0xff]
        %v1561 = vld [vmem:[%s326 + $0x2e4] sm:$0xf]
        %v1562 = vld [vmem:[%s326 + $0x2e8] sm:$0xff]
        %v1563 = vld [vmem:[%s326 + $0x2f0] sm:$0xf]
        %v1564 = vld [vmem:[%s326 + $0x2f4] sm:$0xff]
        %v1565 = vld [vmem:[%s326 + $0x2fc] sm:$0xf]
        %v1694 = vunpack.c.l.b16 %v1438
        %v1695 = vunpack.c.h.b16 %v1438
        %v1696 = vunpack.c.l.b16 %v1439
        %v1697 = vunpack.c.l.b16 %v1440
        %v1698 = vunpack.c.h.b16 %v1440
        %v1699 = vunpack.c.l.b16 %v1441
        %v1700 = vunpack.c.l.b16 %v1442
        %v1701 = vunpack.c.h.b16 %v1442
        %v1702 = vunpack.c.l.b16 %v1443
        %v1703 = vunpack.c.l.b16 %v1444
        %v1704 = vunpack.c.h.b16 %v1444
        %v1705 = vunpack.c.l.b16 %v1445
        %v1706 = vunpack.c.l.b16 %v1446
        %v1707 = vunpack.c.h.b16 %v1446
        %v1708 = vunpack.c.l.b16 %v1447
        %v1709 = vunpack.c.l.b16 %v1448
        %v1710 = vunpack.c.h.b16 %v1448
        %v1711 = vunpack.c.l.b16 %v1449
        %v1712 = vunpack.c.l.b16 %v1450
        %v1713 = vunpack.c.h.b16 %v1450
        %v1714 = vunpack.c.l.b16 %v1451
        %v1715 = vunpack.c.l.b16 %v1452
        %v1716 = vunpack.c.h.b16 %v1452
        %v1717 = vunpack.c.l.b16 %v1453
        %v1718 = vunpack.c.l.b16 %v1454
        %v1719 = vunpack.c.h.b16 %v1454
        %v1720 = vunpack.c.l.b16 %v1455
        %v1721 = vunpack.c.l.b16 %v1456
        %v1722 = vunpack.c.h.b16 %v1456
        %v1723 = vunpack.c.l.b16 %v1457
        %v1724 = vunpack.c.l.b16 %v1458
        %v1725 = vunpack.c.h.b16 %v1458
        %v1726 = vunpack.c.l.b16 %v1459
        %v1727 = vunpack.c.l.b16 %v1460
        %v1728 = vunpack.c.h.b16 %v1460
        %v1729 = vunpack.c.l.b16 %v1461
        %v1730 = vunpack.c.l.b16 %v1462
        %v1731 = vunpack.c.h.b16 %v1462
        %v1732 = vunpack.c.l.b16 %v1463
        %v1733 = vunpack.c.l.b16 %v1464
        %v1734 = vunpack.c.h.b16 %v1464
        %v1735 = vunpack.c.l.b16 %v1465
        %v1736 = vunpack.c.l.b16 %v1466
        %v1737 = vunpack.c.h.b16 %v1466
        %v1738 = vunpack.c.l.b16 %v1467
        %v1739 = vunpack.c.l.b16 %v1468
        %v1740 = vunpack.c.h.b16 %v1468
        %v1741 = vunpack.c.l.b16 %v1469
        %v1742 = vunpack.c.l.b16 %v1470
        %v1743 = vunpack.c.h.b16 %v1470
        %v1744 = vunpack.c.l.b16 %v1471
        %v1745 = vunpack.c.l.b16 %v1472
        %v1746 = vunpack.c.h.b16 %v1472
        %v1747 = vunpack.c.l.b16 %v1473
        %v1748 = vunpack.c.l.b16 %v1474
        %v1749 = vunpack.c.h.b16 %v1474
        %v1750 = vunpack.c.l.b16 %v1475
        %v1751 = vunpack.c.l.b16 %v1476
        %v1752 = vunpack.c.h.b16 %v1476
        %v1753 = vunpack.c.l.b16 %v1477
        %v1754 = vunpack.c.l.b16 %v1478
        %v1755 = vunpack.c.h.b16 %v1478
        %v1756 = vunpack.c.l.b16 %v1479
        %v1757 = vunpack.c.l.b16 %v1480
        %v1758 = vunpack.c.h.b16 %v1480
        %v1759 = vunpack.c.l.b16 %v1481
        %v1760 = vunpack.c.l.b16 %v1482
        %v1761 = vunpack.c.h.b16 %v1482
        %v1762 = vunpack.c.l.b16 %v1483
        %v1763 = vunpack.c.l.b16 %v1484
        %v1764 = vunpack.c.h.b16 %v1484
        %v1765 = vunpack.c.l.b16 %v1485
        %v1766 = vunpack.c.l.b16 %v1486
        %v1767 = vunpack.c.h.b16 %v1486
        %v1768 = vunpack.c.l.b16 %v1487
        %v1769 = vunpack.c.l.b16 %v1488
        %v1770 = vunpack.c.h.b16 %v1488
        %v1771 = vunpack.c.l.b16 %v1489
        %v1772 = vunpack.c.l.b16 %v1490
        %v1773 = vunpack.c.h.b16 %v1490
        %v1774 = vunpack.c.l.b16 %v1491
        %v1775 = vunpack.c.l.b16 %v1492
        %v1776 = vunpack.c.h.b16 %v1492
        %v1777 = vunpack.c.l.b16 %v1493
        %v1778 = vunpack.c.l.b16 %v1494
        %v1779 = vunpack.c.h.b16 %v1494
        %v1780 = vunpack.c.l.b16 %v1495
        %v1781 = vunpack.c.l.b16 %v1496
        %v1782 = vunpack.c.h.b16 %v1496
        %v1783 = vunpack.c.l.b16 %v1497
        %v1784 = vunpack.c.l.b16 %v1498
        %v1785 = vunpack.c.h.b16 %v1498
        %v1786 = vunpack.c.l.b16 %v1499
        %v1787 = vunpack.c.l.b16 %v1500
        %v1788 = vunpack.c.h.b16 %v1500
        %v1789 = vunpack.c.l.b16 %v1501
        %v1790 = vunpack.c.l.b16 %v1502
        %v1791 = vunpack.c.h.b16 %v1502
        %v1792 = vunpack.c.l.b16 %v1503
        %v1793 = vunpack.c.l.b16 %v1504
        %v1794 = vunpack.c.h.b16 %v1504
        %v1795 = vunpack.c.l.b16 %v1505
        %v1796 = vunpack.c.l.b16 %v1506
        %v1797 = vunpack.c.h.b16 %v1506
        %v1798 = vunpack.c.l.b16 %v1507
        %v1799 = vunpack.c.l.b16 %v1508
        %v1800 = vunpack.c.h.b16 %v1508
        %v1801 = vunpack.c.l.b16 %v1509
        %v1802 = vunpack.c.l.b16 %v1510
        %v1803 = vunpack.c.h.b16 %v1510
        %v1804 = vunpack.c.l.b16 %v1511
        %v1805 = vunpack.c.l.b16 %v1512
        %v1806 = vunpack.c.h.b16 %v1512
        %v1807 = vunpack.c.l.b16 %v1513
        %v1808 = vunpack.c.l.b16 %v1514
        %v1809 = vunpack.c.h.b16 %v1514
        %v1810 = vunpack.c.l.b16 %v1515
        %v1811 = vunpack.c.l.b16 %v1516
        %v1812 = vunpack.c.h.b16 %v1516
        %v1813 = vunpack.c.l.b16 %v1517
        %v1814 = vunpack.c.l.b16 %v1518
        %v1815 = vunpack.c.h.b16 %v1518
        %v1816 = vunpack.c.l.b16 %v1519
        %v1817 = vunpack.c.l.b16 %v1520
        %v1818 = vunpack.c.h.b16 %v1520
        %v1819 = vunpack.c.l.b16 %v1521
        %v1820 = vunpack.c.l.b16 %v1522
        %v1821 = vunpack.c.h.b16 %v1522
        %v1822 = vunpack.c.l.b16 %v1523
        %v1823 = vunpack.c.l.b16 %v1524
        %v1824 = vunpack.c.h.b16 %v1524
        %v1825 = vunpack.c.l.b16 %v1525
        %v1826 = vunpack.c.l.b16 %v1526
        %v1827 = vunpack.c.h.b16 %v1526
        %v1828 = vunpack.c.l.b16 %v1527
        %v1829 = vunpack.c.l.b16 %v1528
        %v1830 = vunpack.c.h.b16 %v1528
        %v1831 = vunpack.c.l.b16 %v1529
        %v1832 = vunpack.c.l.b16 %v1530
        %v1833 = vunpack.c.h.b16 %v1530
        %v1834 = vunpack.c.l.b16 %v1531
        %v1835 = vunpack.c.l.b16 %v1532
        %v1836 = vunpack.c.h.b16 %v1532
        %v1837 = vunpack.c.l.b16 %v1533
        %v1838 = vunpack.c.l.b16 %v1534
        %v1839 = vunpack.c.h.b16 %v1534
        %v1840 = vunpack.c.l.b16 %v1535
        %v1841 = vunpack.c.l.b16 %v1536
        %v1842 = vunpack.c.h.b16 %v1536
        %v1843 = vunpack.c.l.b16 %v1537
        %v1844 = vunpack.c.l.b16 %v1538
        %v1845 = vunpack.c.h.b16 %v1538
        %v1846 = vunpack.c.l.b16 %v1539
        %v1847 = vunpack.c.l.b16 %v1540
        %v1848 = vunpack.c.h.b16 %v1540
        %v1849 = vunpack.c.l.b16 %v1541
        %v1850 = vunpack.c.l.b16 %v1542
        %v1851 = vunpack.c.h.b16 %v1542
        %v1852 = vunpack.c.l.b16 %v1543
        %v1853 = vunpack.c.l.b16 %v1544
        %v1854 = vunpack.c.h.b16 %v1544
        %v1855 = vunpack.c.l.b16 %v1545
        %v1856 = vunpack.c.l.b16 %v1546
        %v1857 = vunpack.c.h.b16 %v1546
        %v1858 = vunpack.c.l.b16 %v1547
        %v1859 = vunpack.c.l.b16 %v1548
        %v1860 = vunpack.c.h.b16 %v1548
        %v1861 = vunpack.c.l.b16 %v1549
        %v1862 = vunpack.c.l.b16 %v1550
        %v1863 = vunpack.c.h.b16 %v1550
        %v1864 = vunpack.c.l.b16 %v1551
        %v1865 = vunpack.c.l.b16 %v1552
        %v1866 = vunpack.c.h.b16 %v1552
        %v1867 = vunpack.c.l.b16 %v1553
        %v1868 = vunpack.c.l.b16 %v1554
        %v1869 = vunpack.c.h.b16 %v1554
        %v1870 = vunpack.c.l.b16 %v1555
        %v1871 = vunpack.c.l.b16 %v1556
        %v1872 = vunpack.c.h.b16 %v1556
        %v1873 = vunpack.c.l.b16 %v1557
        %v1874 = vunpack.c.l.b16 %v1558
        %v1875 = vunpack.c.h.b16 %v1558
        %v1876 = vunpack.c.l.b16 %v1559
        %v1877 = vunpack.c.l.b16 %v1560
        %v1878 = vunpack.c.h.b16 %v1560
        %v1879 = vunpack.c.l.b16 %v1561
        %v1880 = vunpack.c.l.b16 %v1562
        %v1881 = vunpack.c.h.b16 %v1562
        %v1882 = vunpack.c.l.b16 %v1563
        %v1883 = vunpack.c.l.b16 %v1564
        %v1884 = vunpack.c.h.b16 %v1564
        %v1885 = vunpack.c.l.b16 %v1565
        %v1886 = vpack.c.b16 %v1697, %v1694
        %v1887 = vpack.c.b16 %v1698, %v1695
        %v1888 = vpack.c.b16 %v1699, %v1696
        %v1889 = vpack.c.b16 %v1703, %v1700
        %v1890 = vpack.c.b16 %v1704, %v1701
        %v1891 = vpack.c.b16 %v1705, %v1702
        %v1892 = vpack.c.b16 %v1709, %v1706
        %v1893 = vpack.c.b16 %v1710, %v1707
        %v1894 = vpack.c.b16 %v1711, %v1708
        %v1895 = vpack.c.b16 %v1715, %v1712
        %v1896 = vpack.c.b16 %v1716, %v1713
        %v1897 = vpack.c.b16 %v1717, %v1714
        %v1898 = vpack.c.b16 %v1721, %v1718
        %v1899 = vpack.c.b16 %v1722, %v1719
        %v1900 = vpack.c.b16 %v1723, %v1720
        %v1901 = vpack.c.b16 %v1727, %v1724
        %v1902 = vpack.c.b16 %v1728, %v1725
        %v1903 = vpack.c.b16 %v1729, %v1726
        %v1904 = vpack.c.b16 %v1733, %v1730
        %v1905 = vpack.c.b16 %v1734, %v1731
        %v1906 = vpack.c.b16 %v1735, %v1732
        %v1907 = vpack.c.b16 %v1739, %v1736
        %v1908 = vpack.c.b16 %v1740, %v1737
        %v1909 = vpack.c.b16 %v1741, %v1738
        %v1910 = vpack.c.b16 %v1745, %v1742
        %v1911 = vpack.c.b16 %v1746, %v1743
        %v1912 = vpack.c.b16 %v1747, %v1744
        %v1913 = vpack.c.b16 %v1751, %v1748
        %v1914 = vpack.c.b16 %v1752, %v1749
        %v1915 = vpack.c.b16 %v1753, %v1750
        %v1916 = vpack.c.b16 %v1757, %v1754
        %v1917 = vpack.c.b16 %v1758, %v1755
        %v1918 = vpack.c.b16 %v1759, %v1756
        %v1919 = vpack.c.b16 %v1763, %v1760
        %v1920 = vpack.c.b16 %v1764, %v1761
        %v1921 = vpack.c.b16 %v1765, %v1762
        %v1922 = vpack.c.b16 %v1769, %v1766
        %v1923 = vpack.c.b16 %v1770, %v1767
        %v1924 = vpack.c.b16 %v1771, %v1768
        %v1925 = vpack.c.b16 %v1775, %v1772
        %v1926 = vpack.c.b16 %v1776, %v1773
        %v1927 = vpack.c.b16 %v1777, %v1774
        %v1928 = vpack.c.b16 %v1781, %v1778
        %v1929 = vpack.c.b16 %v1782, %v1779
        %v1930 = vpack.c.b16 %v1783, %v1780
        %v1931 = vpack.c.b16 %v1787, %v1784
        %v1932 = vpack.c.b16 %v1788, %v1785
        %v1933 = vpack.c.b16 %v1789, %v1786
        %v1934 = vpack.c.b16 %v1793, %v1790
        %v1935 = vpack.c.b16 %v1794, %v1791
        %v1936 = vpack.c.b16 %v1795, %v1792
        %v1937 = vpack.c.b16 %v1799, %v1796
        %v1938 = vpack.c.b16 %v1800, %v1797
        %v1939 = vpack.c.b16 %v1801, %v1798
        %v1940 = vpack.c.b16 %v1805, %v1802
        %v1941 = vpack.c.b16 %v1806, %v1803
        %v1942 = vpack.c.b16 %v1807, %v1804
        %v1943 = vpack.c.b16 %v1811, %v1808
        %v1944 = vpack.c.b16 %v1812, %v1809
        %v1945 = vpack.c.b16 %v1813, %v1810
        %v1946 = vpack.c.b16 %v1817, %v1814
        %v1947 = vpack.c.b16 %v1818, %v1815
        %v1948 = vpack.c.b16 %v1819, %v1816
        %v1949 = vpack.c.b16 %v1823, %v1820
        %v1950 = vpack.c.b16 %v1824, %v1821
        %v1951 = vpack.c.b16 %v1825, %v1822
        %v1952 = vpack.c.b16 %v1829, %v1826
        %v1953 = vpack.c.b16 %v1830, %v1827
        %v1954 = vpack.c.b16 %v1831, %v1828
        %v1955 = vpack.c.b16 %v1835, %v1832
        %v1956 = vpack.c.b16 %v1836, %v1833
        %v1957 = vpack.c.b16 %v1837, %v1834
        %v1958 = vpack.c.b16 %v1841, %v1838
        %v1959 = vpack.c.b16 %v1842, %v1839
        %v1960 = vpack.c.b16 %v1843, %v1840
        %v1961 = vpack.c.b16 %v1847, %v1844
        %v1962 = vpack.c.b16 %v1848, %v1845
        %v1963 = vpack.c.b16 %v1849, %v1846
        %v1964 = vpack.c.b16 %v1853, %v1850
        %v1965 = vpack.c.b16 %v1854, %v1851
        %v1966 = vpack.c.b16 %v1855, %v1852
        %v1967 = vpack.c.b16 %v1859, %v1856
        %v1968 = vpack.c.b16 %v1860, %v1857
        %v1969 = vpack.c.b16 %v1861, %v1858
        %v1970 = vpack.c.b16 %v1865, %v1862
        %v1971 = vpack.c.b16 %v1866, %v1863
        %v1972 = vpack.c.b16 %v1867, %v1864
        %v1973 = vpack.c.b16 %v1871, %v1868
        %v1974 = vpack.c.b16 %v1872, %v1869
        %v1975 = vpack.c.b16 %v1873, %v1870
        %v1976 = vpack.c.b16 %v1877, %v1874
        %v1977 = vpack.c.b16 %v1878, %v1875
        %v1978 = vpack.c.b16 %v1879, %v1876
        %v1979 = vpack.c.b16 %v1883, %v1880
        %v1980 = vpack.c.b16 %v1884, %v1881
        %v1981 = vpack.c.b16 %v1885, %v1882
        %2078 = vmatprep.subr.bf16.mxu0 %v1887
        %2079 = vmatpush1.bf16.msra.mxu0 %v1886
        %2080 = vmatprep.subr.bf16.mxu0 %v1890
        %2081 = vmatpush1.bf16.msra.mxu0 %v1889
        %2082 = vmatprep.subr.bf16.mxu0 %v1893
        %2083 = vmatpush1.bf16.msra.mxu0 %v1892
        %2084 = vmatprep.subr.bf16.mxu0 %v1896
        %2085 = vmatpush1.bf16.msra.mxu0 %v1895
        %2086 = vmatprep.subr.bf16.mxu0 %v1899
        %2087 = vmatpush1.bf16.msra.mxu0 %v1898
        %2088 = vmatprep.subr.bf16.mxu0 %v1902
        %2089 = vmatpush1.bf16.msra.mxu0 %v1901
        %2090 = vmatprep.subr.bf16.mxu0 %v1905
        %2091 = vmatpush1.bf16.msra.mxu0 %v1904
        %2092 = vmatprep.subr.bf16.mxu0 %v1908
        %2093 = vmatpush1.bf16.msra.mxu0 %v1907
        %2094 = vmatprep.subr.bf16.mxu0 %v1911
        %2095 = vmatpush1.bf16.msra.mxu0 %v1910
        %2096 = vmatprep.subr.bf16.mxu0 %v1914
        %2097 = vmatpush1.bf16.msra.mxu0 %v1913
        %2098 = vmatprep.subr.bf16.mxu0 %v1917
        %2099 = vmatpush1.bf16.msra.mxu0 %v1916
        %2100 = vmatprep.subr.bf16.mxu0 %v1920
        %2101 = vmatpush1.bf16.msra.mxu0 %v1919
        %2102 = vmatprep.subr.bf16.mxu0 %v1923
        %2103 = vmatpush1.bf16.msra.mxu0 %v1922
        %2104 = vmatprep.subr.bf16.mxu0 %v1926
        %2105 = vmatpush1.bf16.msra.mxu0 %v1925
        %2106 = vmatprep.subr.bf16.mxu0 %v1929
        %2107 = vmatpush1.bf16.msra.mxu0 %v1928
        %2108 = vmatprep.subr.bf16.mxu0 %v1932
        %2109 = vmatpush1.bf16.msra.mxu0 %v1931
        %2110 = vmatprep.mubr.bf16.mxu0 %v1423
        %2111 = vmatmul.mubr.bf16.gmra.mrb[0].mxu0 %v1422
        %v2112 = vpop.f32.mrb[0].mxu0
        %v2113 = vadd.f32 0.0, %v2112
        %v2114 = vpop.f32.mrb[0].mxu0
        %v2115 = vadd.f32 0.0, %v2114
        %v2116 = vpop.f32.mrb[0].mxu0
        %v2117 = vadd.f32 0.0, %v2116
        %v2118 = vpop.f32.mrb[0].mxu0
        %v2119 = vadd.f32 0.0, %v2118
        %2120 = vmatprep.mubr.bf16.mxu0 %v1427
        %2121 = vmatmul.mubr.bf16.gmra.mrb[0].mxu0 %v1426
        %v2122 = vpop.f32.mrb[0].mxu0
        %v2123 = vadd.f32 0.0, %v2122
        %v2124 = vpop.f32.mrb[0].mxu0
        %v2125 = vadd.f32 0.0, %v2124
        %v2126 = vpop.f32.mrb[0].mxu0
        %v2127 = vadd.f32 0.0, %v2126
        %v2128 = vpop.f32.mrb[0].mxu0
        %v2129 = vadd.f32 0.0, %v2128
        %2130 = vmatprep.mubr.bf16.mxu0 %v1431
        %2131 = vmatmul.mubr.bf16.gmra.mrb[0].mxu0 %v1430
        %v2132 = vpop.f32.mrb[0].mxu0
        %v2133 = vadd.f32 0.0, %v2132
        %v2134 = vpop.f32.mrb[0].mxu0
        %v2135 = vadd.f32 0.0, %v2134
        %v2136 = vpop.f32.mrb[0].mxu0
        %v2137 = vadd.f32 0.0, %v2136
        %v2138 = vpop.f32.mrb[0].mxu0
        %v2139 = vadd.f32 0.0, %v2138
        %2140 = vmatprep.mubr.bf16.mxu0 %v1435
        %2141 = vmatmul.mubr.bf16.gmra.mrb[0].mxu0 %v1434
        %v2142 = vpop.f32.mrb[0].mxu0
        %v2143 = vadd.f32 0.0, %v2142
        %v2144 = vpop.f32.mrb[0].mxu0
        %v2145 = vadd.f32 0.0, %v2144
        %v2146 = vpop.f32.mrb[0].mxu0
        %v2147 = vadd.f32 0.0, %v2146
        %v2148 = vpop.f32.mrb[0].mxu0
        %v2149 = vadd.f32 0.0, %v2148
        %2150 = vdwg.mxu0
        %2151 = vmatprep.subr.bf16.mxu0 %v1935
        %2152 = vmatpush1.bf16.msra.mxu0 %v1934
        %2153 = vmatprep.subr.bf16.mxu0 %v1938
        %2154 = vmatpush1.bf16.msra.mxu0 %v1937
        %2155 = vmatprep.subr.bf16.mxu0 %v1941
        %2156 = vmatpush1.bf16.msra.mxu0 %v1940
        %2157 = vmatprep.subr.bf16.mxu0 %v1944
        %2158 = vmatpush1.bf16.msra.mxu0 %v1943
        %2159 = vmatprep.subr.bf16.mxu0 %v1947
        %2160 = vmatpush1.bf16.msra.mxu0 %v1946
        %2161 = vmatprep.subr.bf16.mxu0 %v1950
        %2162 = vmatpush1.bf16.msra.mxu0 %v1949
        %2163 = vmatprep.subr.bf16.mxu0 %v1953
        %2164 = vmatpush1.bf16.msra.mxu0 %v1952
        %2165 = vmatprep.subr.bf16.mxu0 %v1956
        %2166 = vmatpush1.bf16.msra.mxu0 %v1955
        %2167 = vmatprep.subr.bf16.mxu0 %v1959
        %2168 = vmatpush1.bf16.msra.mxu0 %v1958
        %2169 = vmatprep.subr.bf16.mxu0 %v1962
        %2170 = vmatpush1.bf16.msra.mxu0 %v1961
        %2171 = vmatprep.subr.bf16.mxu0 %v1965
        %2172 = vmatpush1.bf16.msra.mxu0 %v1964
        %2173 = vmatprep.subr.bf16.mxu0 %v1968
        %2174 = vmatpush1.bf16.msra.mxu0 %v1967
        %2175 = vmatprep.subr.bf16.mxu0 %v1971
        %2176 = vmatpush1.bf16.msra.mxu0 %v1970
        %2177 = vmatprep.subr.bf16.mxu0 %v1974
        %2178 = vmatpush1.bf16.msra.mxu0 %v1973
        %2179 = vmatprep.subr.bf16.mxu0 %v1977
        %2180 = vmatpush1.bf16.msra.mxu0 %v1976
        %2181 = vmatprep.subr.bf16.mxu0 %v1980
        %2182 = vmatpush1.bf16.msra.mxu0 %v1979
        %2183 = vmatprep.mubr.bf16.mxu0 %v1425
        %2184 = vmatmul.mubr.bf16.gmra.mrb[0].mxu0 %v1424
        %v2185 = vpop.f32.mrb[0].mxu0
        %v2186 = vadd.f32 %v2113, %v2185
        %v2187 = vpop.f32.mrb[0].mxu0
        %v2188 = vadd.f32 %v2115, %v2187
        %v2189 = vpop.f32.mrb[0].mxu0
        %v2190 = vadd.f32 %v2117, %v2189
        %v2191 = vpop.f32.mrb[0].mxu0
        %v2192 = vadd.f32 %v2119, %v2191
        %2193 = vmatprep.mubr.bf16.mxu0 %v1429
        %2194 = vmatmul.mubr.bf16.gmra.mrb[0].mxu0 %v1428
        %v2195 = vpop.f32.mrb[0].mxu0
        %v2196 = vadd.f32 %v2123, %v2195
        %v2197 = vpop.f32.mrb[0].mxu0
        %v2198 = vadd.f32 %v2125, %v2197
        %v2199 = vpop.f32.mrb[0].mxu0
        %v2200 = vadd.f32 %v2127, %v2199
        %v2201 = vpop.f32.mrb[0].mxu0
        %v2202 = vadd.f32 %v2129, %v2201
        %2203 = vmatprep.mubr.bf16.mxu0 %v1433
        %2204 = vmatmul.mubr.bf16.gmra.mrb[0].mxu0 %v1432
        %v2205 = vpop.f32.mrb[0].mxu0
        %v2206 = vadd.f32 %v2133, %v2205
        %v2207 = vpop.f32.mrb[0].mxu0
        %v2208 = vadd.f32 %v2135, %v2207
        %v2209 = vpop.f32.mrb[0].mxu0
        %v2210 = vadd.f32 %v2137, %v2209
        %v2211 = vpop.f32.mrb[0].mxu0
        %v2212 = vadd.f32 %v2139, %v2211
        %2213 = vmatprep.mubr.bf16.mxu0 %v1437
        %2214 = vmatmul.mubr.bf16.gmra.mrb[0].mxu0 %v1436
        %v2215 = vpop.f32.mrb[0].mxu0
        %v2216 = vadd.f32 %v2143, %v2215
        %v2217 = vpop.f32.mrb[0].mxu0
        %v2218 = vadd.f32 %v2145, %v2217
        %v2219 = vpop.f32.mrb[0].mxu0
        %v2220 = vadd.f32 %v2147, %v2219
        %v2221 = vpop.f32.mrb[0].mxu0
        %v2222 = vadd.f32 %v2149, %v2221
        %2223 = vdwg.mxu0
        %2224 = vmatprep.subr.bf16.mxu0 0
        %2225 = vmatpush1.bf16.msra.mxu0 %v1888
        %2226 = vmatprep.subr.bf16.mxu0 0
        %2227 = vmatpush1.bf16.msra.mxu0 %v1891
        %2228 = vmatprep.subr.bf16.mxu0 0
        %2229 = vmatpush1.bf16.msra.mxu0 %v1894
        %2230 = vmatprep.subr.bf16.mxu0 0
        %2231 = vmatpush1.bf16.msra.mxu0 %v1897
        %2232 = vmatprep.subr.bf16.mxu0 0
        %2233 = vmatpush1.bf16.msra.mxu0 %v1900
        %2234 = vmatprep.subr.bf16.mxu0 0
        %2235 = vmatpush1.bf16.msra.mxu0 %v1903
        %2236 = vmatprep.subr.bf16.mxu0 0
        %2237 = vmatpush1.bf16.msra.mxu0 %v1906
        %2238 = vmatprep.subr.bf16.mxu0 0
        %2239 = vmatpush1.bf16.msra.mxu0 %v1909
        %2240 = vmatprep.subr.bf16.mxu0 0
        %2241 = vmatpush1.bf16.msra.mxu0 %v1912
        %2242 = vmatprep.subr.bf16.mxu0 0
        %2243 = vmatpush1.bf16.msra.mxu0 %v1915
        %2244 = vmatprep.subr.bf16.mxu0 0
        %2245 = vmatpush1.bf16.msra.mxu0 %v1918
        %2246 = vmatprep.subr.bf16.mxu0 0
        %2247 = vmatpush1.bf16.msra.mxu0 %v1921
        %2248 = vmatprep.subr.bf16.mxu0 0
        %2249 = vmatpush1.bf16.msra.mxu0 %v1924
        %2250 = vmatprep.subr.bf16.mxu0 0
        %2251 = vmatpush1.bf16.msra.mxu0 %v1927
        %2252 = vmatprep.subr.bf16.mxu0 0
        %2253 = vmatpush1.bf16.msra.mxu0 %v1930
        %2254 = vmatprep.subr.bf16.mxu0 0
        %2255 = vmatpush1.bf16.msra.mxu0 %v1933
        %2256 = vmatprep.mubr.bf16.mxu0 %v1423
        %2257 = vmatmul.mubr.bf16.gmra.mrb[0].mxu0 %v1422
        %v2258 = vpop.f32.mrb[0].mxu0
        %v2259 = vadd.f32 0.0, %v2258
        %v2260 = vpop.f32.mrb[0].mxu0
        %v2261 = vpop.f32.mrb[0].mxu0
        %v2262 = vadd.f32 0.0, %v2261
        %v2263 = vpop.f32.mrb[0].mxu0
        %2264 = vmatprep.mubr.bf16.mxu0 %v1427
        %2265 = vmatmul.mubr.bf16.gmra.mrb[0].mxu0 %v1426
        %v2266 = vpop.f32.mrb[0].mxu0
        %v2267 = vadd.f32 0.0, %v2266
        %v2268 = vpop.f32.mrb[0].mxu0
        %v2269 = vpop.f32.mrb[0].mxu0
        %v2270 = vadd.f32 0.0, %v2269
        %v2271 = vpop.f32.mrb[0].mxu0
        %2272 = vmatprep.mubr.bf16.mxu0 %v1431
        %2273 = vmatmul.mubr.bf16.gmra.mrb[0].mxu0 %v1430
        %v2274 = vpop.f32.mrb[0].mxu0
        %v2275 = vadd.f32 0.0, %v2274
        %v2276 = vpop.f32.mrb[0].mxu0
        %v2277 = vpop.f32.mrb[0].mxu0
        %v2278 = vadd.f32 0.0, %v2277
        %v2279 = vpop.f32.mrb[0].mxu0
        %2280 = vmatprep.mubr.bf16.mxu0 %v1435
        %2281 = vmatmul.mubr.bf16.gmra.mrb[0].mxu0 %v1434
        %v2282 = vpop.f32.mrb[0].mxu0
        %v2283 = vadd.f32 0.0, %v2282
        %v2284 = vpop.f32.mrb[0].mxu0
        %v2285 = vpop.f32.mrb[0].mxu0
        %v2286 = vadd.f32 0.0, %v2285
        %v2287 = vpop.f32.mrb[0].mxu0
        %2288 = vdwg.mxu0
        %2289 = vmatprep.subr.bf16.mxu0 0
        %2290 = vmatpush1.bf16.msra.mxu0 %v1936
        %2291 = vmatprep.subr.bf16.mxu0 0
        %2292 = vmatpush1.bf16.msra.mxu0 %v1939
        %2293 = vmatprep.subr.bf16.mxu0 0
        %2294 = vmatpush1.bf16.msra.mxu0 %v1942
        %2295 = vmatprep.subr.bf16.mxu0 0
        %2296 = vmatpush1.bf16.msra.mxu0 %v1945
        %2297 = vmatprep.subr.bf16.mxu0 0
        %2298 = vmatpush1.bf16.msra.mxu0 %v1948
        %2299 = vmatprep.subr.bf16.mxu0 0
        %2300 = vmatpush1.bf16.msra.mxu0 %v1951
        %2301 = vmatprep.subr.bf16.mxu0 0
        %2302 = vmatpush1.bf16.msra.mxu0 %v1954
        %2303 = vmatprep.subr.bf16.mxu0 0
        %2304 = vmatpush1.bf16.msra.mxu0 %v1957
        %2305 = vmatprep.subr.bf16.mxu0 0
        %2306 = vmatpush1.bf16.msra.mxu0 %v1960
        %2307 = vmatprep.subr.bf16.mxu0 0
        %2308 = vmatpush1.bf16.msra.mxu0 %v1963
        %2309 = vmatprep.subr.bf16.mxu0 0
        %2310 = vmatpush1.bf16.msra.mxu0 %v1966
        %2311 = vmatprep.subr.bf16.mxu0 0
        %2312 = vmatpush1.bf16.msra.mxu0 %v1969
        %2313 = vmatprep.subr.bf16.mxu0 0
        %2314 = vmatpush1.bf16.msra.mxu0 %v1972
        %2315 = vmatprep.subr.bf16.mxu0 0
        %2316 = vmatpush1.bf16.msra.mxu0 %v1975
        %2317 = vmatprep.subr.bf16.mxu0 0
        %2318 = vmatpush1.bf16.msra.mxu0 %v1978
        %2319 = vmatprep.subr.bf16.mxu0 0
        %2320 = vmatpush1.bf16.msra.mxu0 %v1981
        %2321 = vmatprep.mubr.bf16.mxu0 %v1425
        %2322 = vmatmul.mubr.bf16.gmra.mrb[0].mxu0 %v1424
        %v2323 = vpop.f32.mrb[0].mxu0
        %v2324 = vadd.f32 %v2259, %v2323
        %v2325 = vpop.f32.mrb[0].mxu0
        %v2326 = vpop.f32.mrb[0].mxu0
        %v2327 = vadd.f32 %v2262, %v2326
        %v2328 = vpop.f32.mrb[0].mxu0
        %2329 = vmatprep.mubr.bf16.mxu0 %v1429
        %2330 = vmatmul.mubr.bf16.gmra.mrb[0].mxu0 %v1428
        %v2331 = vpop.f32.mrb[0].mxu0
        %v2332 = vadd.f32 %v2267, %v2331
        %v2333 = vpop.f32.mrb[0].mxu0
        %v2334 = vpop.f32.mrb[0].mxu0
        %v2335 = vadd.f32 %v2270, %v2334
        %v2336 = vpop.f32.mrb[0].mxu0
        %2337 = vmatprep.mubr.bf16.mxu0 %v1433
        %2338 = vmatmul.mubr.bf16.gmra.mrb[0].mxu0 %v1432
        %v2339 = vpop.f32.mrb[0].mxu0
        %v2340 = vadd.f32 %v2275, %v2339
        %v2341 = vpop.f32.mrb[0].mxu0
        %v2342 = vpop.f32.mrb[0].mxu0
        %v2343 = vadd.f32 %v2278, %v2342
        %v2344 = vpop.f32.mrb[0].mxu0
        %2345 = vmatprep.mubr.bf16.mxu0 %v1437
        %2346 = vmatmul.mubr.bf16.gmra.mrb[0].mxu0 %v1436
        %v2347 = vpop.f32.mrb[0].mxu0
        %v2348 = vadd.f32 %v2283, %v2347
        %v2349 = vpop.f32.mrb[0].mxu0
        %v2350 = vpop.f32.mrb[0].mxu0
        %v2351 = vadd.f32 %v2286, %v2350
        %v2352 = vpop.f32.mrb[0].mxu0
        %2353 = vdwg.mxu0
        %v2354 = vadd.f32 %v1398, %v2186
        %v2355 = vadd.f32 %v1399, %v2188
        %v2356 = vadd.f32 %v1400, %v2324
        %v2357 = vadd.f32 %v1401, %v2190
        %v2358 = vadd.f32 %v1402, %v2192
        %v2359 = vadd.f32 %v1403, %v2327
        %v2360 = vadd.f32 %v1404, %v2196
        %v2361 = vadd.f32 %v1405, %v2198
        %v2362 = vadd.f32 %v1406, %v2332
        %v2363 = vadd.f32 %v1407, %v2200
        %v2364 = vadd.f32 %v1408, %v2202
        %v2365 = vadd.f32 %v1409, %v2335
        %v2366 = vadd.f32 %v1410, %v2206
        %v2367 = vadd.f32 %v1411, %v2208
        %v2368 = vadd.f32 %v1412, %v2340
        %v2369 = vadd.f32 %v1413, %v2210
        %v2370 = vadd.f32 %v1414, %v2212
        %v2371 = vadd.f32 %v1415, %v2343
        %v2372 = vadd.f32 %v1416, %v2216
        %v2373 = vadd.f32 %v1417, %v2218
        %v2374 = vadd.f32 %v1418, %v2348
        %v2375 = vadd.f32 %v1419, %v2220
        %v2376 = vadd.f32 %v1420, %v2222
        %v2377 = vadd.f32 %v1421, %v2351
        %2378 = vst [vmem:[#allocation2] sm:$0xff] %v2354
        %2379 = vst [vmem:[#allocation2 + $0x8] sm:$0xff] %v2355
        %2380 = vst [vmem:[#allocation2 + $0x10] sm:$0xff] %v2356
        %2381 = vst [vmem:[#allocation2 + $0x18] sm:$0xff] %v2357
        %2382 = vst [vmem:[#allocation2 + $0x20] sm:$0xff] %v2358
        %2383 = vst [vmem:[#allocation2 + $0x28] sm:$0xff] %v2359
        %2384 = vst [vmem:[#allocation2 + $0x30] sm:$0xff] %v2360
        %2385 = vst [vmem:[#allocation2 + $0x38] sm:$0xff] %v2361
        %2386 = vst [vmem:[#allocation2 + $0x40] sm:$0xff] %v2362
        %2387 = vst [vmem:[#allocation2 + $0x48] sm:$0xff] %v2363
        %2388 = vst [vmem:[#allocation2 + $0x50] sm:$0xff] %v2364
        %2389 = vst [vmem:[#allocation2 + $0x58] sm:$0xff] %v2365
        %2390 = vst [vmem:[#allocation2 + $0x60] sm:$0xff] %v2366
        %2391 = vst [vmem:[#allocation2 + $0x68] sm:$0xff] %v2367
        %2392 = vst [vmem:[#allocation2 + $0x70] sm:$0xff] %v2368
        %2393 = vst [vmem:[#allocation2 + $0x78] sm:$0xff] %v2369
        %2394 = vst [vmem:[#allocation2 + $0x80] sm:$0xff] %v2370
        %2395 = vst [vmem:[#allocation2 + $0x88] sm:$0xff] %v2371
        %2396 = vst [vmem:[#allocation2 + $0x90] sm:$0xff] %v2372
        %2397 = vst [vmem:[#allocation2 + $0x98] sm:$0xff] %v2373
        %2398 = vst [vmem:[#allocation2 + $0xa0] sm:$0xff] %v2374
        %2399 = vst [vmem:[#allocation2 + $0xa8] sm:$0xff] %v2375
        %2400 = vst [vmem:[#allocation2 + $0xb0] sm:$0xff] %v2376
        %2401 = vst [vmem:[#allocation2 + $0xb8] sm:$0xff] %v2377
        %p2402 = scmp.eq.s32.totalorder %s31, 2
        // Predicated region
        $region65: #{tpu_custom_call.1} parent=39 // pred_check
          %p2403 = pneg %p2402
        $region66: #{tpu_custom_call.1} parent=39 // pred_check_branch
          %2405 = sbr.rel (%p2403) target = $region68
        $region67: #{tpu_custom_call.1} parent=39 // pred_region
          %v2406 = vld [vmem:[#allocation2] sm:$0xff]
          %v2407 = vld [vmem:[#allocation2 + $0x8] sm:$0xff]
          %v2408 = vld [vmem:[#allocation2 + $0x10] sm:$0xff]
          %v2409 = vld [vmem:[#allocation2 + $0x18] sm:$0xff]
          %v2410 = vld [vmem:[#allocation2 + $0x20] sm:$0xff]
          %v2411 = vld [vmem:[#allocation2 + $0x28] sm:$0xff]
          %v2412 = vld [vmem:[#allocation2 + $0x30] sm:$0xff]
          %v2413 = vld [vmem:[#allocation2 + $0x38] sm:$0xff]
          %v2414 = vld [vmem:[#allocation2 + $0x40] sm:$0xff]
          %v2415 = vld [vmem:[#allocation2 + $0x48] sm:$0xff]
          %v2416 = vld [vmem:[#allocation2 + $0x50] sm:$0xff]
          %v2417 = vld [vmem:[#allocation2 + $0x58] sm:$0xff]
          %v2418 = vld [vmem:[#allocation2 + $0x60] sm:$0xff]
          %v2419 = vld [vmem:[#allocation2 + $0x68] sm:$0xff]
          %v2420 = vld [vmem:[#allocation2 + $0x70] sm:$0xff]
          %v2421 = vld [vmem:[#allocation2 + $0x78] sm:$0xff]
          %v2422 = vld [vmem:[#allocation2 + $0x80] sm:$0xff]
          %v2423 = vld [vmem:[#allocation2 + $0x88] sm:$0xff]
          %v2424 = vld [vmem:[#allocation2 + $0x90] sm:$0xff]
          %v2425 = vld [vmem:[#allocation2 + $0x98] sm:$0xff]
          %v2426 = vld [vmem:[#allocation2 + $0xa0] sm:$0xff]
          %v2427 = vld [vmem:[#allocation2 + $0xa8] sm:$0xff]
          %v2428 = vld [vmem:[#allocation2 + $0xb0] sm:$0xff]
          %v2429 = vld [vmem:[#allocation2 + $0xb8] sm:$0xff]
          %v2430 = vld [vmem:[#allocation13] sm:$0x7]
          %v2432 = vlaneseq
          %v2433 = vshrl.u32 %v2432, 7
          %v2434 = vsub.s32 0, %v2433
          %v2435 = vrot.slane %v2430, %v2434
          %v2436 = vlaneseq
          %v2437 = vshrl.u32 %v2436, 7
          %v2438 = vsub.s32 1, %v2437
          %v2439 = vrot.slane %v2430, %v2438
          %v2440 = vlaneseq
          %v2441 = vshrl.u32 %v2440, 7
          %v2442 = vsub.s32 2, %v2441
          %v2443 = vrot.slane %v2430, %v2442
          %v2447 = vadd.f32 %v2406, %v2435
          %v2448 = vadd.f32 %v2407, %v2439
          %v2449 = vadd.f32 %v2408, %v2443
          %v2450 = vadd.f32 %v2409, %v2435
          %v2451 = vadd.f32 %v2410, %v2439
          %v2452 = vadd.f32 %v2411, %v2443
          %v2453 = vadd.f32 %v2412, %v2435
          %v2454 = vadd.f32 %v2413, %v2439
          %v2455 = vadd.f32 %v2414, %v2443
          %v2456 = vadd.f32 %v2415, %v2435
          %v2457 = vadd.f32 %v2416, %v2439
          %v2458 = vadd.f32 %v2417, %v2443
          %v2459 = vadd.f32 %v2418, %v2435
          %v2460 = vadd.f32 %v2419, %v2439
          %v2461 = vadd.f32 %v2420, %v2443
          %v2462 = vadd.f32 %v2421, %v2435
          %v2463 = vadd.f32 %v2422, %v2439
          %v2464 = vadd.f32 %v2423, %v2443
          %v2465 = vadd.f32 %v2424, %v2435
          %v2466 = vadd.f32 %v2425, %v2439
          %v2467 = vadd.f32 %v2426, %v2443
          %v2468 = vadd.f32 %v2427, %v2435
          %v2469 = vadd.f32 %v2428, %v2439
          %v2470 = vadd.f32 %v2429, %v2443
          %2471 = vst [vmem:[#allocation14] sm:$0xff] %v2447
          %2472 = vst [vmem:[#allocation14 + $0x8] sm:$0xff] %v2448
          %2473 = vst [vmem:[#allocation14 + $0x10] sm:$0xff] %v2449
          %2474 = vst [vmem:[#allocation14 + $0x18] sm:$0xff] %v2450
          %2475 = vst [vmem:[#allocation14 + $0x20] sm:$0xff] %v2451
          %2476 = vst [vmem:[#allocation14 + $0x28] sm:$0xff] %v2452
          %2477 = vst [vmem:[#allocation14 + $0x30] sm:$0xff] %v2453
          %2478 = vst [vmem:[#allocation14 + $0x38] sm:$0xff] %v2454
          %2479 = vst [vmem:[#allocation14 + $0x40] sm:$0xff] %v2455
          %2480 = vst [vmem:[#allocation14 + $0x48] sm:$0xff] %v2456
          %2481 = vst [vmem:[#allocation14 + $0x50] sm:$0xff] %v2457
          %2482 = vst [vmem:[#allocation14 + $0x58] sm:$0xff] %v2458
          %2483 = vst [vmem:[#allocation14 + $0x60] sm:$0xff] %v2459
          %2484 = vst [vmem:[#allocation14 + $0x68] sm:$0xff] %v2460
          %2485 = vst [vmem:[#allocation14 + $0x70] sm:$0xff] %v2461
          %2486 = vst [vmem:[#allocation14 + $0x78] sm:$0xff] %v2462
          %2487 = vst [vmem:[#allocation14 + $0x80] sm:$0xff] %v2463
          %2488 = vst [vmem:[#allocation14 + $0x88] sm:$0xff] %v2464
          %2489 = vst [vmem:[#allocation14 + $0x90] sm:$0xff] %v2465
          %2490 = vst [vmem:[#allocation14 + $0x98] sm:$0xff] %v2466
          %2491 = vst [vmem:[#allocation14 + $0xa0] sm:$0xff] %v2467
          %2492 = vst [vmem:[#allocation14 + $0xa8] sm:$0xff] %v2468
          %2493 = vst [vmem:[#allocation14 + $0xb0] sm:$0xff] %v2469
          %2494 = vst [vmem:[#allocation14 + $0xb8] sm:$0xff] %v2470
        $region68: #{tpu_custom_call.1} parent=39 // pred_fallthru
          _
        // Predicated region
        $region69: #{tpu_custom_call.1} parent=39 // pred_check
          %p2495 = pneg %p181
        $region70: #{tpu_custom_call.1} parent=39 // pred_check_branch
          %2497 = sbr.rel (%p2495) target = $region72
        $region71: #{tpu_custom_call.1} parent=39 // pred_region
          %s2498 = smul.u32 8, %s30
          %s2500 = ssub.s32 3072, 3072
          %2501 = vsyncadd [#allocation7], %s2500
          %s2502 = smul.addr %s2498, 3
          %s2503 = smul.addr %s2502, 128
          %s2504 = scalar_lea.hbm %s6, %s2503
          %s2505 = sshll.u32 [#allocation14], 4
          %s2506 = int_to_ptr.vmem [resolvable:$true] %s2505
          %2511 = dma.vmem_to_hbm [thread:$0]  %s2506, 3072, %s2504, [#allocation7], 384, 384, 24
        $region72: #{tpu_custom_call.1} parent=39 // pred_fallthru
          _
        // Predicated region
        $region73: #{tpu_custom_call.1} parent=39 // pred_check
          %p2512 = pneg %p181
        $region74: #{tpu_custom_call.1} parent=39 // pred_check_branch
          %2514 = sbr.rel (%p2512) target = $region76
        $region75: #{tpu_custom_call.1} parent=39 // pred_region
          %2515 = dma.done [#allocation7], 3072
        $region76: #{tpu_custom_call.1} parent=39 // pred_fallthru
          _
      $region40: #{tpu_custom_call.1} parent=5 // pred_fallthru
        _
      %p2516 = scmp.le.s32.totalorder 2, %s21
      // Predicated region
      $region77: #{tpu_custom_call.1} parent=5 // pred_check
        %p2517 = pneg %p2516
      $region78: #{tpu_custom_call.1} parent=5 // pred_check_branch
        %2519 = sbr.rel (%p2517) target = $region80
      $region79: #{tpu_custom_call.1} parent=5 // pred_region
        %s2520 = ssub.s32 %s21, 2
      $region80: #{tpu_custom_call.1} parent=5 // pred_fallthru
        _
    $region6: #{tpu_custom_call.1} parent=1 // loop_footer
      %s25 = sadd.s32 1, %s21
    $region7: #{tpu_custom_call.1} parent=1 // loop_footer_branch
      %20 = sbr.rel target = $region3
    $region8: #{tpu_custom_call.1} parent=1 // loop_exit
      _
    %2521 = vsyncpa [#allocation6], 1
    %s2522 = scalar_lea.sflag [#allocation6], 1
    %2523 = vsyncpa %s2522, 1
    %2524 = vsyncpa [#allocation9], 1
    %s2525 = scalar_lea.sflag [#allocation9], 1
    %2526 = vsyncpa %s2525, 1
    %2527 = vsyncpa [#allocation12], 1
    %s2528 = scalar_lea.sflag [#allocation12], 1
    %2529 = vsyncpa %s2528, 1
    %2530 = vsyncpa [#allocation7], 1
    %s2531 = scalar_lea.sflag [#allocation7], 1
    %2532 = vsyncpa %s2531, 1

</llo_original>
